<compile_context>
chip_gen: v7x
topology: tpu7x:2x2x1
jax: 0.10.0
libtpu: 0.0.40
codegen_flags: <defaults>
</compile_context>

<pallas_src>
import functools

import jax
import jax.numpy as jnp
from jax.experimental import pallas as pl
from jax.experimental.pallas import tpu as pltpu

F32 = jnp.float32
BF16 = jnp.bfloat16
BN_EPS = 1e-5  # nn.BatchNorm2d default eps


# ---------------------------------------------------------------------------
# Pallas kernel: fused conv(1,3)/s3 + BN + ReLU + conv(1,G) + BN + ReLU
# ---------------------------------------------------------------------------

def _annular_kernel(w1_ref, t1_ref, w2_ref, t2_ref, x_ref, o_ref, h_ref,
                    *, groups, cout):
    # w1: (C, 3*2C)   bf16   first conv weight (BN scale folded in), taps in contraction
    # t1: (C, 1)      f32    fused conv-bias + eval-BN shift
    # w2: (C, G*C)    bf16   second conv weight (BN scale folded in), taps concatenated
    # t2: (C, 1)      f32
    # x : (G, 3*2C, T) bf16  input slab per output-width group, lane axis = B*N tile
    # o : (C, T)      f32
    # h : (G*C, T)    bf16   VMEM scratch holding all stage-1 activations
    tile = x_ref.shape[-1]
    # Hoist the (C,1)->(C,tile) broadcast out of the group loop (no CSE in JAX).
    t1b = jnp.broadcast_to(t1_ref[...], (cout, tile))
    for g in range(groups):                       # static unroll (G = 2 or 3)
        h = jnp.dot(w1_ref[...], x_ref[g], preferred_element_type=jnp.float32)
        h_ref[g * cout:(g + 1) * cout, :] = jnp.maximum(h + t1b, 0.0).astype(BF16)
    # Single (C, G*C) @ (G*C, tile) matmul: 96-deep contraction instead of G small ones.
    y = jnp.dot(w2_ref[...], h_ref[...], preferred_element_type=jnp.float32)
    o_ref[...] = jnp.maximum(y + t2_ref[...], 0.0).astype(o_ref.dtype)


# ---------------------------------------------------------------------------
# Wrapper: BN folding, layout transform, tiling, pallas_call
# ---------------------------------------------------------------------------

def _fuse_bias_bn(bias, bn):
    s = bn['gamma'] * jax.lax.rsqrt(bn['rv'] + BN_EPS)
    t = s * (bias - bn['rm']) + bn['beta']
    return s, t


def _choose_tile(bn, c, groups):
    """Largest lane tile (multiple of 128, <=4096) keeping >=2 grid steps when
    possible (v7x megacore), <~12.5% padding waste, and a double-buffered VMEM
    footprint under ~14 MiB (fits v5e's default scoped VMEM)."""
    bn128 = -(-bn // 128) * 128
    cin2 = 2 * c

    def vmem_bytes(t):
        x_blk = groups * 3 * cin2 * t * 2          # bf16 input block
        o_blk = c * t * 4                          # f32 output block
        h_scr = groups * c * t * 2                 # bf16 scratch
        return 2 * x_blk + 2 * o_blk + h_scr       # in/out double-buffered

    best = 128
    for t in (128, 256, 512, 1024, 2048, 4096):
        if vmem_bytes(t) > 14 * (1 << 20):
            break
        steps = -(-bn128 // t)
        waste = steps * t - bn128
        if steps >= 2 and waste * 8 <= steps * t:
            best = t
    bn_pad = -(-bn128 // best) * best
    return best, bn_pad


def annular_conv_forward(features, params, knn_num):
    """features: (B, 2C, N, knn_num) -> (B, C, N, 1)."""
    assert knn_num in (9, 6)
    B, Cin2, N, K = features.shape
    assert K == knn_num
    C = Cin2 // 2
    G = knn_num // 3                      # output width of the first (strided) conv

    # ---- fold conv bias + eval-mode BN; fold scales into the weights ----------
    s1, t1 = _fuse_bias_bn(params['conv1']['b'], params['bn1'])
    s2, t2 = _fuse_bias_bn(params['conv2']['b'], params['bn2'])
    # first conv weight: (C, 2C, 1, 3) -> rows (tap, cin) to match the x slabs
    w1 = (s1[:, None, None, None] * params['conv1']['w'])[:, :, 0, :]
    w1 = w1.transpose(0, 2, 1).reshape(C, 3 * Cin2).astype(BF16)
    # second conv weight: (C, C, 1, G) -> (C, G*C), columns ordered (tap, cin)
    w2 = (s2[:, None, None, None] * params['conv2']['w'])[:, :, 0, :]
    w2 = w2.transpose(0, 2, 1).reshape(C, G * C).astype(BF16)

    # ---- tile selection, then input relayout (bf16 cast FIRST, so cast+transpose+
    #      pad fuse into a single half-width copy pass) --------------------------
    BN = B * N
    tile, bn_pad = _choose_tile(BN, C, G)
    xr = features.astype(BF16).transpose(3, 1, 0, 2).reshape(G, 3 * Cin2, BN)
    if bn_pad != BN:
        # NOTE: padded lane columns compute relu(t2) garbage; they are sliced off below.
        xr = jnp.pad(xr, ((0, 0), (0, 0), (0, bn_pad - BN)))

    kernel = functools.partial(_annular_kernel, groups=G, cout=C)
    out_flat = pl.pallas_call(
        kernel,
        out_shape=jax.ShapeDtypeStruct((C, bn_pad), F32),
        grid=(bn_pad // tile,),
        in_specs=[
            pl.BlockSpec((C, 3 * Cin2), lambda i: (0, 0)),
            pl.BlockSpec((C, 1), lambda i: (0, 0)),
            pl.BlockSpec((C, G * C), lambda i: (0, 0)),
            pl.BlockSpec((C, 1), lambda i: (0, 0)),
            pl.BlockSpec((G, 3 * Cin2, tile), lambda i: (0, 0, i)),
        ],
        out_specs=pl.BlockSpec((C, tile), lambda i: (0, i)),
        scratch_shapes=[pltpu.VMEM((G * C, tile), BF16)],
        compiler_params=pltpu.CompilerParams(
            dimension_semantics=("parallel",),
            vmem_limit_bytes=32 * 1024 * 1024),
    )(
        w1,
        t1.reshape(C, 1).astype(F32),
        w2,
        t2.reshape(C, 1).astype(F32),
        xr,
    )

    # (C, B*N) -> (B, C, N, 1)
    out = out_flat[:, :BN].reshape(C, B, N).transpose(1, 0, 2)[..., None]
    return out


# ---------------------------------------------------------------------------
# Pure-JAX reference (same folded weights / bf16 matmul precision) for checking
# ---------------------------------------------------------------------------

def reference_forward(features, params, knn_num):
    B, Cin2, N, K = features.shape
    C = Cin2 // 2
    G = knn_num // 3
    s1, t1 = _fuse_bias_bn(params['conv1']['b'], params['bn1'])
    s2, t2 = _fuse_bias_bn(params['conv2']['b'], params['bn2'])
    w1 = (s1[:, None, None, None] * params['conv1']['w'])[:, :, 0, :].astype(BF16)  # (C,2C,3)
    w2 = (s2[:, None, None, None] * params['conv2']['w'])[:, :, 0, :].astype(BF16)  # (C,C,G)
    x = features.astype(BF16).reshape(B, Cin2, N, G, 3)            # k = 3*g + t
    h = jnp.einsum('oit,bingt->bong', w1, x, preferred_element_type=jnp.float32)
    h = jnp.maximum(h + t1[None, :, None, None], 0.0)
    y = jnp.einsum('oig,bing->bon', w2, h.astype(BF16),
                   preferred_element_type=jnp.float32)
    y = jnp.maximum(y + t2[None, :, None], 0.0)
    return y[..., None]


# ---------------------------------------------------------------------------
# Deterministic parameter initialization (shapes per the module __init__)
# ---------------------------------------------------------------------------

def init_params(key, in_channel, knn_num):
    C = in_channel
    G = knn_num // 3
    keys = iter(jax.random.split(key, 16))

    def nrm(shape, s=0.1):
        return s * jax.random.normal(next(keys), shape, F32)

    def uni(shape):
        return jax.random.uniform(next(keys), shape, F32, 0.5, 1.5)

    def bn_p(c):
        return {'gamma': uni((c,)), 'beta': nrm((c,), 0.05),
                'rm': nrm((c,), 0.05), 'rv': uni((c,))}

    return {
        'conv1': {'w': nrm((C, 2 * C, 1, 3)), 'b': nrm((C,), 0.05)},
        'bn1': bn_p(C),
        'conv2': {'w': nrm((C, C, 1, G)), 'b': nrm((C,), 0.05)},
        'bn2': bn_p(C),
    }


if __name__ == "__main__":
    key = jax.random.PRNGKey(0)

    # knn_num = 9 case
    B, in_channel, N, knn = 2, 32, 128, 9
    kx, kp, kx2, kp2 = jax.random.split(key, 4)
    features = jax.random.normal(kx, (B, 2 * in_channel, N, knn), F32)
    params = init_params(kp, in_channel, knn)

    fwd = jax.jit(lambda inp: annular_conv_forward(inp, params, knn))
    out = jax.block_until_ready(fwd(features))
    assert out.shape == (B, in_channel, N, 1), out.shape
    assert bool(jnp.all(jnp.isfinite(out)))

    ref = jax.block_until_ready(
        jax.jit(lambda inp: reference_forward(inp, params, knn))(features))
    assert bool(jnp.allclose(out, ref, rtol=1e-2, atol=1e-2)), (
        float(jnp.max(jnp.abs(out - ref))))

    # knn_num = 6 case (second conv kernel (1,2))
    knn6 = 6
    features6 = jax.random.normal(kx2, (B, 2 * in_channel, N, knn6), F32)
    params6 = init_params(kp2, in_channel, knn6)
    out6 = jax.block_until_ready(
        jax.jit(lambda inp: annular_conv_forward(inp, params6, knn6))(features6))
    ref6 = jax.block_until_ready(
        jax.jit(lambda inp: reference_forward(inp, params6, knn6))(features6))
    assert out6.shape == (B, in_channel, N, 1), out6.shape
    assert bool(jnp.allclose(out6, ref6, rtol=1e-2, atol=1e-2)), (
        float(jnp.max(jnp.abs(out6 - ref6))))

    print("KERNEL_OK")
</pallas_src>

<mosaic_0001>
module attributes {stable_mosaic.version = 11 : i64} {
  func.func @_annular_kernel(%arg0: i32, %arg1: memref<32x192xbf16, #tpu.memory_space<vmem>>, %arg2: memref<32x1xf32, #tpu.memory_space<vmem>>, %arg3: memref<32x96xbf16, #tpu.memory_space<vmem>>, %arg4: memref<32x1xf32, #tpu.memory_space<vmem>>, %arg5: memref<3x192x128xbf16, #tpu.memory_space<vmem>>, %arg6: memref<32x128xf32, #tpu.memory_space<vmem>>, %arg7: memref<96x128xbf16, #tpu.memory_space<vmem>>) attributes {dimension_semantics = [#tpu.dimension_semantics<parallel>], iteration_bounds = array<i64: 2>, scalar_prefetch = 0 : i64, scratch_operands = 1 : i64, tpu.core_type = #tpu.core_type<tc>, window_params = [{pipeline_mode = #tpu.pipeline_mode<synchronous>, transform_indices = @transform_0, window_bounds = array<i64: 32, 192>}, {pipeline_mode = #tpu.pipeline_mode<synchronous>, transform_indices = @transform_1, window_bounds = array<i64: 32, 1>}, {pipeline_mode = #tpu.pipeline_mode<synchronous>, transform_indices = @transform_2, window_bounds = array<i64: 32, 96>}, {pipeline_mode = #tpu.pipeline_mode<synchronous>, transform_indices = @transform_3, window_bounds = array<i64: 32, 1>}, {transform_indices = @transform_4, window_bounds = array<i64: 3, 192, 128>}, {transform_indices = @transform_5, window_bounds = array<i64: 32, 128>}]} {
    %c0 = arith.constant 0 : index
    %c0_0 = arith.constant 0 : index
    %0 = vector.load %arg2[%c0, %c0_0] : memref<32x1xf32, #tpu.memory_space<vmem>>, vector<32x1xf32>
    %1 = vector.shape_cast %0 : vector<32x1xf32> to vector<32x1xf32>
    %2 = vector.broadcast %1 : vector<32x1xf32> to vector<32x128xf32>
    %c0_1 = arith.constant 0 : index
    %c0_2 = arith.constant 0 : index
    %3 = vector.load %arg1[%c0_1, %c0_2] : memref<32x192xbf16, #tpu.memory_space<vmem>>, vector<32x192xbf16>
    %c0_3 = arith.constant 0 : index
    %c0_4 = arith.constant 0 : index
    %c0_5 = arith.constant 0 : index
    %4 = vector.load %arg5[%c0_3, %c0_4, %c0_5] : memref<3x192x128xbf16, #tpu.memory_space<vmem>>, vector<1x192x128xbf16>
    %5 = vector.shape_cast %4 : vector<1x192x128xbf16> to vector<192x128xbf16>
    %cst = arith.constant dense<0.000000e+00> : vector<32x128xf32>
    %6 = tpu.matmul %3, %5, %cst {dimension_numbers = #tpu.dot_dimension_numbers<[1], [0], [0], [1], [0, 0, 1, 1], [], []>} : vector<32x192xbf16>, vector<192x128xbf16>, vector<32x128xf32> -> vector<32x128xf32>
    %7 = arith.addf %6, %2 : vector<32x128xf32>
    %cst_6 = arith.constant 0.000000e+00 : f32
    %8 = vector.broadcast %cst_6 : f32 to vector<32x128xf32>
    %9 = arith.maximumf %7, %8 : vector<32x128xf32>
    %10 = arith.truncf %9 : vector<32x128xf32> to vector<32x128xbf16>
    %c0_7 = arith.constant 0 : index
    %c0_8 = arith.constant 0 : index
    %11 = vector.load %arg7[%c0_7, %c0_8] : memref<96x128xbf16, #tpu.memory_space<vmem>>, vector<32x128xbf16>
    tpu.vector_store %arg7[%c0_7, %c0_8], %10 {strides = array<i32>} : memref<96x128xbf16, #tpu.memory_space<vmem>>, vector<32x128xbf16>,
    %c0_9 = arith.constant 0 : index
    %c0_10 = arith.constant 0 : index
    %12 = vector.load %arg1[%c0_9, %c0_10] : memref<32x192xbf16, #tpu.memory_space<vmem>>, vector<32x192xbf16>
    %c1 = arith.constant 1 : index
    %c0_11 = arith.constant 0 : index
    %c0_12 = arith.constant 0 : index
    %13 = vector.load %arg5[%c1, %c0_11, %c0_12] : memref<3x192x128xbf16, #tpu.memory_space<vmem>>, vector<1x192x128xbf16>
    %14 = vector.shape_cast %13 : vector<1x192x128xbf16> to vector<192x128xbf16>
    %cst_13 = arith.constant dense<0.000000e+00> : vector<32x128xf32>
    %15 = tpu.matmul %12, %14, %cst_13 {dimension_numbers = #tpu.dot_dimension_numbers<[1], [0], [0], [1], [0, 0, 1, 1], [], []>} : vector<32x192xbf16>, vector<192x128xbf16>, vector<32x128xf32> -> vector<32x128xf32>
    %16 = arith.addf %15, %2 : vector<32x128xf32>
    %cst_14 = arith.constant 0.000000e+00 : f32
    %17 = vector.broadcast %cst_14 : f32 to vector<32x128xf32>
    %18 = arith.maximumf %16, %17 : vector<32x128xf32>
    %19 = arith.truncf %18 : vector<32x128xf32> to vector<32x128xbf16>
    %c32 = arith.constant 32 : index
    %c0_15 = arith.constant 0 : index
    %20 = vector.load %arg7[%c32, %c0_15] : memref<96x128xbf16, #tpu.memory_space<vmem>>, vector<32x128xbf16>
    tpu.vector_store %arg7[%c32, %c0_15], %19 {strides = array<i32>} : memref<96x128xbf16, #tpu.memory_space<vmem>>, vector<32x128xbf16>,
    %c0_16 = arith.constant 0 : index
    %c0_17 = arith.constant 0 : index
    %21 = vector.load %arg1[%c0_16, %c0_17] : memref<32x192xbf16, #tpu.memory_space<vmem>>, vector<32x192xbf16>
    %c2 = arith.constant 2 : index
    %c0_18 = arith.constant 0 : index
    %c0_19 = arith.constant 0 : index
    %22 = vector.load %arg5[%c2, %c0_18, %c0_19] : memref<3x192x128xbf16, #tpu.memory_space<vmem>>, vector<1x192x128xbf16>
    %23 = vector.shape_cast %22 : vector<1x192x128xbf16> to vector<192x128xbf16>
    %cst_20 = arith.constant dense<0.000000e+00> : vector<32x128xf32>
    %24 = tpu.matmul %21, %23, %cst_20 {dimension_numbers = #tpu.dot_dimension_numbers<[1], [0], [0], [1], [0, 0, 1, 1], [], []>} : vector<32x192xbf16>, vector<192x128xbf16>, vector<32x128xf32> -> vector<32x128xf32>
    %25 = arith.addf %24, %2 : vector<32x128xf32>
    %cst_21 = arith.constant 0.000000e+00 : f32
    %26 = vector.broadcast %cst_21 : f32 to vector<32x128xf32>
    %27 = arith.maximumf %25, %26 : vector<32x128xf32>
    %28 = arith.truncf %27 : vector<32x128xf32> to vector<32x128xbf16>
    %c64 = arith.constant 64 : index
    %c0_22 = arith.constant 0 : index
    %29 = vector.load %arg7[%c64, %c0_22] : memref<96x128xbf16, #tpu.memory_space<vmem>>, vector<32x128xbf16>
    tpu.vector_store %arg7[%c64, %c0_22], %28 {strides = array<i32>} : memref<96x128xbf16, #tpu.memory_space<vmem>>, vector<32x128xbf16>,
    %c0_23 = arith.constant 0 : index
    %c0_24 = arith.constant 0 : index
    %30 = vector.load %arg3[%c0_23, %c0_24] : memref<32x96xbf16, #tpu.memory_space<vmem>>, vector<32x96xbf16>
    %c0_25 = arith.constant 0 : index
    %c0_26 = arith.constant 0 : index
    %31 = vector.load %arg7[%c0_25, %c0_26] : memref<96x128xbf16, #tpu.memory_space<vmem>>, vector<96x128xbf16>
    %cst_27 = arith.constant dense<0.000000e+00> : vector<32x128xf32>
    %32 = tpu.matmul %30, %31, %cst_27 {dimension_numbers = #tpu.dot_dimension_numbers<[1], [0], [0], [1], [0, 0, 1, 1], [], []>} : vector<32x96xbf16>, vector<96x128xbf16>, vector<32x128xf32> -> vector<32x128xf32>
    %c0_28 = arith.constant 0 : index
    %c0_29 = arith.constant 0 : index
    %33 = vector.load %arg4[%c0_28, %c0_29] : memref<32x1xf32, #tpu.memory_space<vmem>>, vector<32x1xf32>
    %34 = vector.broadcast %33 : vector<32x1xf32> to vector<32x128xf32>
    %35 = arith.addf %32, %34 : vector<32x128xf32>
    %cst_30 = arith.constant 0.000000e+00 : f32
    %36 = vector.broadcast %cst_30 : f32 to vector<32x128xf32>
    %37 = arith.maximumf %35, %36 : vector<32x128xf32>
    %c0_31 = arith.constant 0 : index
    %c0_32 = arith.constant 0 : index
    %38 = vector.load %arg6[%c0_31, %c0_32] : memref<32x128xf32, #tpu.memory_space<vmem>>, vector<32x128xf32>
    tpu.vector_store %arg6[%c0_31, %c0_32], %37 {strides = array<i32>} : memref<32x128xf32, #tpu.memory_space<vmem>>, vector<32x128xf32>,
    return
  }
  func.func @transform_0(%arg0: i32) -> (i32, i32) {
    %c0_i32 = arith.constant 0 : i32
    %c0_i32_0 = arith.constant 0 : i32
    %c0_i32_1 = arith.constant 0 : i32
    return %c0_i32, %c0_i32_0 : i32, i32
  }
  func.func @transform_1(%arg0: i32) -> (i32, i32) {
    %c0_i32 = arith.constant 0 : i32
    %c0_i32_0 = arith.constant 0 : i32
    %c0_i32_1 = arith.constant 0 : i32
    return %c0_i32, %c0_i32_0 : i32, i32
  }
  func.func @transform_2(%arg0: i32) -> (i32, i32) {
    %c0_i32 = arith.constant 0 : i32
    %c0_i32_0 = arith.constant 0 : i32
    %c0_i32_1 = arith.constant 0 : i32
    return %c0_i32, %c0_i32_0 : i32, i32
  }
  func.func @transform_3(%arg0: i32) -> (i32, i32) {
    %c0_i32 = arith.constant 0 : i32
    %c0_i32_0 = arith.constant 0 : i32
    %c0_i32_1 = arith.constant 0 : i32
    return %c0_i32, %c0_i32_0 : i32, i32
  }
  func.func @transform_4(%arg0: i32) -> (i32, i32, i32) {
    %c0_i32 = arith.constant 0 : i32
    %c0_i32_0 = arith.constant 0 : i32
    %c0_i32_1 = arith.constant 0 : i32
    return %c0_i32, %c0_i32_0, %arg0 : i32, i32, i32
  }
  func.func @transform_5(%arg0: i32) -> (i32, i32) {
    %c0_i32 = arith.constant 0 : i32
    %c0_i32_0 = arith.constant 0 : i32
    return %c0_i32, %arg0 : i32, i32
  }
}

</mosaic_0001>

<llo_original>
// kernel: _lambda_.1
$region0: #{_lambda_.1}
  #allocation0 [shape = 'u32[]', space=smem, size = 0x4, offset = 0x4, fixed_abs, tag = 'smem constant byte address 0x4 - core index']
  #allocation1 [shape = 'u32[144,128]{1,0:T(1,128)}', space=vmem, size = 0x12000, scoped, tag = 'internal scratch']
  #allocation2 [shape = 'bf16[96,128]{1,0:T(16,128)(2,1)}', space=vmem, size = 0x6000, scoped, tag = 'scratch operand']
  %s0 = inlined_call_operand.vmem [shape: bf16[32,192], index: 0, kind: input, shape index: {}]
  %s1 = inlined_call_operand.vmem [shape: f32[32,1], index: 1, kind: input, shape index: {}]
  %s2 = inlined_call_operand.vmem [shape: bf16[32,96], index: 2, kind: input, shape index: {}]
  %s3 = inlined_call_operand.vmem [shape: f32[32,1], index: 3, kind: input, shape index: {}]
  %s4 = inlined_call_operand.vmem [shape: bf16[3,192,256], index: 4, kind: input, shape index: {}]
  %s5 = inlined_call_operand.vmem [shape: f32[32,256], index: 5, kind: output, shape index: {}]
  %s6 = sld [smem:[#allocation0]]
  $region128: #{_lambda_.1} parent=0
    _
  %s8 = ssub.s32 1, %s6
  %s9 = scalar_select 0, %s8, %s6
  $region1: #{_lambda_.1} parent=0
    #allocation3 [shape = 'u8[294912]{0}', space=vmem, size = 0x48000, scoped, tag = 'input window, operand 4']
    #allocation4 [shape = 'u8[32768]{0}', space=vmem, size = 0x8000, scoped, tag = 'output window, operand 0']
    loop: start=0, step=1, limit=4
    $region2: #{_lambda_.1} parent=1 // loop_pre_header
      _
    $region3: #{_lambda_.1} parent=1 // loop_header
      %s11 = sphi 0, %s15
      %p12 = scmp.ge.s32.totalorder %s11, 4
      %s19 = sphi 0, %s19
      %s21 = sphi 0, %s19
      %s22 = sphi 0, %s21
      %s36 = sphi 0, %s22
      %s40 = sphi 0, %s40
      %s42 = sphi 0, %s40
      %s43 = sphi 0, %s42
      %s57 = sphi 0, %s43
      %s61 = sphi 0, %s61
      %s63 = sphi 0, %s61
      %s64 = sphi 0, %s63
      %s78 = sphi 0, %s64
      %s82 = sphi 0, %s82
      %s84 = sphi 0, %s82
      %s85 = sphi 0, %s84
      %s99 = sphi 0, %s85
      %s105 = sphi 0, %s107
      %s108 = sphi 0, %s105
      %s109 = sphi 0, %s108
      %s125 = sphi 0, %s109
      %s131 = sphi 0, %s133
      %s134 = sphi 0, %s131
      %s135 = sphi 0, %s134
      %s151 = sphi 0, %s135
    $region4: #{_lambda_.1} parent=1 // loop_header_branch
      %14 = sbr.rel (%p12) target = $region8
    $region5: #{_lambda_.1} parent=1 // loop_body
      %s16 = ssub.s32 %s11, 1
      %s17 = ssub.s32 %s11, 2
      %s18 = sadd.s32 %s11, 1
      %s20 = sadd.s32 %s19, 1
      %p23 = scmp.eq.s32.totalorder %s11, 1
      %p24 = scmp.ne.s32.totalorder %s19, %s21
      %p25 = scmp.eq.s32.totalorder %s11, 0
      %p26 = por %p24, %p25
      %p27 = scmp.ne.s32.totalorder %s19, %s21
      %p28 = scmp.eq.s32.totalorder %s16, 1
      %p29 = por %p27, %p28
      %p30 = scmp.ne.s32.totalorder %s21, %s22
      %p31 = scmp.eq.s32.totalorder %s16, 0
      %p32 = por %p30, %p31
      %p33 = scmp.ne.s32.totalorder %s21, %s22
      %p34 = scmp.eq.s32.totalorder %s17, 1
      %p35 = por %p33, %p34
      %p37 = scmp.ne.s32.totalorder %s22, %s36
      %p38 = scmp.eq.s32.totalorder %s17, 0
      %p39 = por %p37, %p38
      %s41 = sadd.s32 %s40, 1
      %p44 = scmp.eq.s32.totalorder %s11, 1
      %p45 = scmp.ne.s32.totalorder %s40, %s42
      %p46 = scmp.eq.s32.totalorder %s11, 0
      %p47 = por %p45, %p46
      %p48 = scmp.ne.s32.totalorder %s40, %s42
      %p49 = scmp.eq.s32.totalorder %s16, 1
      %p50 = por %p48, %p49
      %p51 = scmp.ne.s32.totalorder %s42, %s43
      %p52 = scmp.eq.s32.totalorder %s16, 0
      %p53 = por %p51, %p52
      %p54 = scmp.ne.s32.totalorder %s42, %s43
      %p55 = scmp.eq.s32.totalorder %s17, 1
      %p56 = por %p54, %p55
      %p58 = scmp.ne.s32.totalorder %s43, %s57
      %p59 = scmp.eq.s32.totalorder %s17, 0
      %p60 = por %p58, %p59
      %s62 = sadd.s32 %s61, 1
      %p65 = scmp.eq.s32.totalorder %s11, 1
      %p66 = scmp.ne.s32.totalorder %s61, %s63
      %p67 = scmp.eq.s32.totalorder %s11, 0
      %p68 = por %p66, %p67
      %p69 = scmp.ne.s32.totalorder %s61, %s63
      %p70 = scmp.eq.s32.totalorder %s16, 1
      %p71 = por %p69, %p70
      %p72 = scmp.ne.s32.totalorder %s63, %s64
      %p73 = scmp.eq.s32.totalorder %s16, 0
      %p74 = por %p72, %p73
      %p75 = scmp.ne.s32.totalorder %s63, %s64
      %p76 = scmp.eq.s32.totalorder %s17, 1
      %p77 = por %p75, %p76
      %p79 = scmp.ne.s32.totalorder %s64, %s78
      %p80 = scmp.eq.s32.totalorder %s17, 0
      %p81 = por %p79, %p80
      %s83 = sadd.s32 %s82, 1
      %p86 = scmp.eq.s32.totalorder %s11, 1
      %p87 = scmp.ne.s32.totalorder %s82, %s84
      %p88 = scmp.eq.s32.totalorder %s11, 0
      %p89 = por %p87, %p88
      %p90 = scmp.ne.s32.totalorder %s82, %s84
      %p91 = scmp.eq.s32.totalorder %s16, 1
      %p92 = por %p90, %p91
      %p93 = scmp.ne.s32.totalorder %s84, %s85
      %p94 = scmp.eq.s32.totalorder %s16, 0
      %p95 = por %p93, %p94
      %p96 = scmp.ne.s32.totalorder %s84, %s85
      %p97 = scmp.eq.s32.totalorder %s17, 1
      %p98 = por %p96, %p97
      %p100 = scmp.ne.s32.totalorder %s85, %s99
      %p101 = scmp.eq.s32.totalorder %s17, 0
      %p102 = por %p100, %p101
      %s103 = ssub.s32 %s11, %s18
      %p104 = scmp.eq.s32.totalorder %s103, 0
      %s106 = sadd.s32 %s105, 1
      %s107 = scalar_select %p104, %s105, %s106
      %p110 = pneg %p104
      %p111 = scmp.eq.s32.totalorder %s11, 1
      %p112 = por %p110, %p111
      %p113 = scmp.ne.s32.totalorder %s105, %s108
      %p114 = scmp.eq.s32.totalorder %s11, 0
      %p115 = por %p113, %p114
      %p116 = scmp.ne.s32.totalorder %s105, %s108
      %p117 = scmp.eq.s32.totalorder %s16, 1
      %p118 = por %p116, %p117
      %p119 = scmp.ne.s32.totalorder %s108, %s109
      %p120 = scmp.eq.s32.totalorder %s16, 0
      %p121 = por %p119, %p120
      %p122 = scmp.ne.s32.totalorder %s108, %s109
      %p123 = scmp.eq.s32.totalorder %s17, 1
      %p124 = por %p122, %p123
      %p126 = scmp.ne.s32.totalorder %s109, %s125
      %p127 = scmp.eq.s32.totalorder %s17, 0
      %p128 = por %p126, %p127
      %s129 = ssub.s32 %s11, %s18
      %p130 = scmp.eq.s32.totalorder %s129, 0
      %s132 = sadd.s32 %s131, 1
      %s133 = scalar_select %p130, %s131, %s132
      %p136 = pneg %p130
      %p137 = scmp.eq.s32.totalorder %s11, 1
      %p138 = por %p136, %p137
      %p139 = scmp.ne.s32.totalorder %s131, %s134
      %p140 = scmp.eq.s32.totalorder %s11, 0
      %p141 = por %p139, %p140
      %p142 = scmp.ne.s32.totalorder %s131, %s134
      %p143 = scmp.eq.s32.totalorder %s16, 1
      %p144 = por %p142, %p143
      %p145 = scmp.ne.s32.totalorder %s134, %s135
      %p146 = scmp.eq.s32.totalorder %s16, 0
      %p147 = por %p145, %p146
      %p148 = scmp.ne.s32.totalorder %s134, %s135
      %p149 = scmp.eq.s32.totalorder %s17, 1
      %p150 = por %p148, %p149
      %p152 = scmp.ne.s32.totalorder %s135, %s151
      %p153 = scmp.eq.s32.totalorder %s17, 0
      %p154 = por %p152, %p153
      %p155 = scmp.le.s32.totalorder 1, %s11
      %p156 = scmp.lt.s32.totalorder %s11, 3
      %p157 = pnand %p155, %p156
      %p158 = pneg %p157
      // Predicated region
      $region9: #{_lambda_.1} parent=5 // pred_check
        _
      $region10: #{_lambda_.1} parent=5 // pred_check_branch
        %160 = sbr.rel (%p157) target = $region12
      $region11: #{_lambda_.1} parent=5 // pred_region
        %s161 = ssub.s32 %s11, 1
        // Predicated region
        $region13: #{_lambda_.1} parent=11 // pred_check
          %p162 = pneg %p32
        $region14: #{_lambda_.1} parent=11 // pred_check_branch
          %164 = sbr.rel (%p162) target = $region16
        $region15: #{_lambda_.1} parent=11 // pred_region
          _
        $region16: #{_lambda_.1} parent=11 // pred_fallthru
          _
        // Predicated region
        $region17: #{_lambda_.1} parent=11 // pred_check
          %p165 = pneg %p53
        $region18: #{_lambda_.1} parent=11 // pred_check_branch
          %167 = sbr.rel (%p165) target = $region20
        $region19: #{_lambda_.1} parent=11 // pred_region
          _
        $region20: #{_lambda_.1} parent=11 // pred_fallthru
          _
        // Predicated region
        $region21: #{_lambda_.1} parent=11 // pred_check
          %p168 = pneg %p74
        $region22: #{_lambda_.1} parent=11 // pred_check_branch
          %170 = sbr.rel (%p168) target = $region24
        $region23: #{_lambda_.1} parent=11 // pred_region
          _
        $region24: #{_lambda_.1} parent=11 // pred_fallthru
          _
        // Predicated region
        $region25: #{_lambda_.1} parent=11 // pred_check
          %p171 = pneg %p95
        $region26: #{_lambda_.1} parent=11 // pred_check_branch
          %173 = sbr.rel (%p171) target = $region28
        $region27: #{_lambda_.1} parent=11 // pred_region
          _
        $region28: #{_lambda_.1} parent=11 // pred_fallthru
          _
      $region12: #{_lambda_.1} parent=5 // pred_fallthru
        _
      %p174 = scmp.lt.s32.totalorder %s11, 2
      // Predicated region
      $region29: #{_lambda_.1} parent=5 // pred_check
        %p175 = pneg %p174
      $region30: #{_lambda_.1} parent=5 // pred_check_branch
        %177 = sbr.rel (%p175) target = $region32
      $region31: #{_lambda_.1} parent=5 // pred_region
        // Predicated region
        $region33: #{_lambda_.1} parent=31 // pred_check
          %p178 = pneg %p115
        $region34: #{_lambda_.1} parent=31 // pred_check_branch
          %180 = sbr.rel (%p178) target = $region36
        $region35: #{_lambda_.1} parent=31 // pred_region
          %s181 = sand.u32 %s105, 1
          %s182 = sand.u32 %s105, 1
          %s183 = smul.addr %s182, 288
          %s184 = scalar_lea.vmem [#allocation3], %s183
          %s185 = smul.addr %s11, 4
          %s186 = scalar_lea.vmem %s4, %s185
          // Predicated region
          $region37: #{_lambda_.1} parent=35 // pred_check
            _
          $region38: #{_lambda_.1} parent=35 // pred_check_branch
            %188 = sbr.rel (0) target = $region40
          $region39: #{_lambda_.1} parent=35 // pred_region
            // Predicated region
            $region41: #{_lambda_.1} parent=39 // pred_check
              _
            $region42: #{_lambda_.1} parent=39 // pred_check_branch
              %190 = sbr.rel target = $region44
            $region43: #{_lambda_.1} parent=39 // pred_region
              // Predicated region
              $region56: #{_lambda_.1} parent=43 // pred_check
                _
              $region57: #{_lambda_.1} parent=43 // pred_check_branch
                %347 = sbr.rel (0) target = $region59
              $region58: #{_lambda_.1} parent=43 // pred_region
                loop: start=0, step=1, limit=1
                $region60: #{_lambda_.1} parent=58 // loop_pre_header
                  _
                $region61: #{_lambda_.1} parent=58 // loop_header
                  %s349 = sphi 0, %s353
                  %p350 = scmp.ge.s32.totalorder %s349, 1
                  %s354 = sphi %s186, %s186
                  %s355 = sphi %s184, %s184
                $region62: #{_lambda_.1} parent=58 // loop_header_branch
                  %352 = sbr.rel (%p350) target = $region66
                $region63: #{_lambda_.1} parent=58 // loop_body
                  _
                $region64: #{_lambda_.1} parent=58 // loop_footer
                  %s353 = sadd.s32 1, %s349
                $region65: #{_lambda_.1} parent=58 // loop_footer_branch
                  %348 = sbr.rel target = $region61
                $region66: #{_lambda_.1} parent=58 // loop_exit
                  _
                loop: start=0, step=1, limit=1
                $region67: #{_lambda_.1} parent=58 // loop_pre_header
                  _
                $region68: #{_lambda_.1} parent=58 // loop_header
                  %s358 = sphi 0, %s362
                  %p359 = scmp.ge.s32.totalorder %s358, 1
                  %s363 = sphi %s186, %s186
                  %s364 = sphi %s184, %s184
                $region69: #{_lambda_.1} parent=58 // loop_header_branch
                  %361 = sbr.rel (%p359) target = $region73
                $region70: #{_lambda_.1} parent=58 // loop_body
                  %v365 = vld [vmem:[%s363] sm:$0xf]
                  %366 = vst [vmem:[%s364] sm:$0xf] %v365
                  %v367 = vld [vmem:[%s363 + $0x8] sm:$0xf]
                  %368 = vst [vmem:[%s364 + $0x4] sm:$0xf] %v367
                  %v369 = vld [vmem:[%s363 + $0x10] sm:$0xf]
                  %370 = vst [vmem:[%s364 + $0x8] sm:$0xf] %v369
                  %v371 = vld [vmem:[%s363 + $0x18] sm:$0xf]
                  %372 = vst [vmem:[%s364 + $0xc] sm:$0xf] %v371
                  %v373 = vld [vmem:[%s363 + $0x20] sm:$0xf]
                  %374 = vst [vmem:[%s364 + $0x10] sm:$0xf] %v373
                  %v375 = vld [vmem:[%s363 + $0x28] sm:$0xf]
                  %376 = vst [vmem:[%s364 + $0x14] sm:$0xf] %v375
                  %v377 = vld [vmem:[%s363 + $0x30] sm:$0xf]
                  %378 = vst [vmem:[%s364 + $0x18] sm:$0xf] %v377
                  %v379 = vld [vmem:[%s363 + $0x38] sm:$0xf]
                  %380 = vst [vmem:[%s364 + $0x1c] sm:$0xf] %v379
                  %v381 = vld [vmem:[%s363 + $0x40] sm:$0xf]
                  %382 = vst [vmem:[%s364 + $0x20] sm:$0xf] %v381
                  %v383 = vld [vmem:[%s363 + $0x48] sm:$0xf]
                  %384 = vst [vmem:[%s364 + $0x24] sm:$0xf] %v383
                  %v385 = vld [vmem:[%s363 + $0x50] sm:$0xf]
                  %386 = vst [vmem:[%s364 + $0x28] sm:$0xf] %v385
                  %v387 = vld [vmem:[%s363 + $0x58] sm:$0xf]
                  %388 = vst [vmem:[%s364 + $0x2c] sm:$0xf] %v387
                  %v389 = vld [vmem:[%s363 + $0x60] sm:$0xf]
                  %390 = vst [vmem:[%s364 + $0x30] sm:$0xf] %v389
                  %v391 = vld [vmem:[%s363 + $0x68] sm:$0xf]
                  %392 = vst [vmem:[%s364 + $0x34] sm:$0xf] %v391
                  %v393 = vld [vmem:[%s363 + $0x70] sm:$0xf]
                  %394 = vst [vmem:[%s364 + $0x38] sm:$0xf] %v393
                  %v395 = vld [vmem:[%s363 + $0x78] sm:$0xf]
                  %396 = vst [vmem:[%s364 + $0x3c] sm:$0xf] %v395
                  %v397 = vld [vmem:[%s363 + $0x80] sm:$0xf]
                  %398 = vst [vmem:[%s364 + $0x40] sm:$0xf] %v397
                  %v399 = vld [vmem:[%s363 + $0x88] sm:$0xf]
                  %400 = vst [vmem:[%s364 + $0x44] sm:$0xf] %v399
                  %v401 = vld [vmem:[%s363 + $0x90] sm:$0xf]
                  %402 = vst [vmem:[%s364 + $0x48] sm:$0xf] %v401
                  %v403 = vld [vmem:[%s363 + $0x98] sm:$0xf]
                  %404 = vst [vmem:[%s364 + $0x4c] sm:$0xf] %v403
                  %v405 = vld [vmem:[%s363 + $0xa0] sm:$0xf]
                  %406 = vst [vmem:[%s364 + $0x50] sm:$0xf] %v405
                  %v407 = vld [vmem:[%s363 + $0xa8] sm:$0xf]
                  %408 = vst [vmem:[%s364 + $0x54] sm:$0xf] %v407
                  %v409 = vld [vmem:[%s363 + $0xb0] sm:$0xf]
                  %410 = vst [vmem:[%s364 + $0x58] sm:$0xf] %v409
                  %v411 = vld [vmem:[%s363 + $0xb8] sm:$0xf]
                  %412 = vst [vmem:[%s364 + $0x5c] sm:$0xf] %v411
                  %v413 = vld [vmem:[%s363 + $0xc0] sm:$0xf]
                  %414 = vst [vmem:[%s364 + $0x60] sm:$0xf] %v413
                  %v415 = vld [vmem:[%s363 + $0xc8] sm:$0xf]
                  %416 = vst [vmem:[%s364 + $0x64] sm:$0xf] %v415
                  %v417 = vld [vmem:[%s363 + $0xd0] sm:$0xf]
                  %418 = vst [vmem:[%s364 + $0x68] sm:$0xf] %v417
                  %v419 = vld [vmem:[%s363 + $0xd8] sm:$0xf]
                  %420 = vst [vmem:[%s364 + $0x6c] sm:$0xf] %v419
                  %v421 = vld [vmem:[%s363 + $0xe0] sm:$0xf]
                  %422 = vst [vmem:[%s364 + $0x70] sm:$0xf] %v421
                  %v423 = vld [vmem:[%s363 + $0xe8] sm:$0xf]
                  %424 = vst [vmem:[%s364 + $0x74] sm:$0xf] %v423
                  %v425 = vld [vmem:[%s363 + $0xf0] sm:$0xf]
                  %426 = vst [vmem:[%s364 + $0x78] sm:$0xf] %v425
                  %v427 = vld [vmem:[%s363 + $0xf8] sm:$0xf]
                  %428 = vst [vmem:[%s364 + $0x7c] sm:$0xf] %v427
                  %v429 = vld [vmem:[%s363 + $0x100] sm:$0xf]
                  %430 = vst [vmem:[%s364 + $0x80] sm:$0xf] %v429
                  %v431 = vld [vmem:[%s363 + $0x108] sm:$0xf]
                  %432 = vst [vmem:[%s364 + $0x84] sm:$0xf] %v431
                  %v433 = vld [vmem:[%s363 + $0x110] sm:$0xf]
                  %434 = vst [vmem:[%s364 + $0x88] sm:$0xf] %v433
                  %v435 = vld [vmem:[%s363 + $0x118] sm:$0xf]
                  %436 = vst [vmem:[%s364 + $0x8c] sm:$0xf] %v435
                  %v437 = vld [vmem:[%s363 + $0x120] sm:$0xf]
                  %438 = vst [vmem:[%s364 + $0x90] sm:$0xf] %v437
                  %v439 = vld [vmem:[%s363 + $0x128] sm:$0xf]
                  %440 = vst [vmem:[%s364 + $0x94] sm:$0xf] %v439
                  %v441 = vld [vmem:[%s363 + $0x130] sm:$0xf]
                  %442 = vst [vmem:[%s364 + $0x98] sm:$0xf] %v441
                  %v443 = vld [vmem:[%s363 + $0x138] sm:$0xf]
                  %444 = vst [vmem:[%s364 + $0x9c] sm:$0xf] %v443
                  %v445 = vld [vmem:[%s363 + $0x140] sm:$0xf]
                  %446 = vst [vmem:[%s364 + $0xa0] sm:$0xf] %v445
                  %v447 = vld [vmem:[%s363 + $0x148] sm:$0xf]
                  %448 = vst [vmem:[%s364 + $0xa4] sm:$0xf] %v447
                  %v449 = vld [vmem:[%s363 + $0x150] sm:$0xf]
                  %450 = vst [vmem:[%s364 + $0xa8] sm:$0xf] %v449
                  %v451 = vld [vmem:[%s363 + $0x158] sm:$0xf]
                  %452 = vst [vmem:[%s364 + $0xac] sm:$0xf] %v451
                  %v453 = vld [vmem:[%s363 + $0x160] sm:$0xf]
                  %454 = vst [vmem:[%s364 + $0xb0] sm:$0xf] %v453
                  %v455 = vld [vmem:[%s363 + $0x168] sm:$0xf]
                  %456 = vst [vmem:[%s364 + $0xb4] sm:$0xf] %v455
                  %v457 = vld [vmem:[%s363 + $0x170] sm:$0xf]
                  %458 = vst [vmem:[%s364 + $0xb8] sm:$0xf] %v457
                  %v459 = vld [vmem:[%s363 + $0x178] sm:$0xf]
                  %460 = vst [vmem:[%s364 + $0xbc] sm:$0xf] %v459
                  %v461 = vld [vmem:[%s363 + $0x180] sm:$0xf]
                  %462 = vst [vmem:[%s364 + $0xc0] sm:$0xf] %v461
                  %v463 = vld [vmem:[%s363 + $0x188] sm:$0xf]
                  %464 = vst [vmem:[%s364 + $0xc4] sm:$0xf] %v463
                  %v465 = vld [vmem:[%s363 + $0x190] sm:$0xf]
                  %466 = vst [vmem:[%s364 + $0xc8] sm:$0xf] %v465
                  %v467 = vld [vmem:[%s363 + $0x198] sm:$0xf]
                  %468 = vst [vmem:[%s364 + $0xcc] sm:$0xf] %v467
                  %v469 = vld [vmem:[%s363 + $0x1a0] sm:$0xf]
                  %470 = vst [vmem:[%s364 + $0xd0] sm:$0xf] %v469
                  %v471 = vld [vmem:[%s363 + $0x1a8] sm:$0xf]
                  %472 = vst [vmem:[%s364 + $0xd4] sm:$0xf] %v471
                  %v473 = vld [vmem:[%s363 + $0x1b0] sm:$0xf]
                  %474 = vst [vmem:[%s364 + $0xd8] sm:$0xf] %v473
                  %v475 = vld [vmem:[%s363 + $0x1b8] sm:$0xf]
                  %476 = vst [vmem:[%s364 + $0xdc] sm:$0xf] %v475
                  %v477 = vld [vmem:[%s363 + $0x1c0] sm:$0xf]
                  %478 = vst [vmem:[%s364 + $0xe0] sm:$0xf] %v477
                  %v479 = vld [vmem:[%s363 + $0x1c8] sm:$0xf]
                  %480 = vst [vmem:[%s364 + $0xe4] sm:$0xf] %v479
                  %v481 = vld [vmem:[%s363 + $0x1d0] sm:$0xf]
                  %482 = vst [vmem:[%s364 + $0xe8] sm:$0xf] %v481
                  %v483 = vld [vmem:[%s363 + $0x1d8] sm:$0xf]
                  %484 = vst [vmem:[%s364 + $0xec] sm:$0xf] %v483
                  %v485 = vld [vmem:[%s363 + $0x1e0] sm:$0xf]
                  %486 = vst [vmem:[%s364 + $0xf0] sm:$0xf] %v485
                  %v487 = vld [vmem:[%s363 + $0x1e8] sm:$0xf]
                  %488 = vst [vmem:[%s364 + $0xf4] sm:$0xf] %v487
                  %v489 = vld [vmem:[%s363 + $0x1f0] sm:$0xf]
                  %490 = vst [vmem:[%s364 + $0xf8] sm:$0xf] %v489
                  %v491 = vld [vmem:[%s363 + $0x1f8] sm:$0xf]
                  %492 = vst [vmem:[%s364 + $0xfc] sm:$0xf] %v491
                  %v493 = vld [vmem:[%s363 + $0x200] sm:$0xf]
                  %494 = vst [vmem:[%s364 + $0x100] sm:$0xf] %v493
                  %v495 = vld [vmem:[%s363 + $0x208] sm:$0xf]
                  %496 = vst [vmem:[%s364 + $0x104] sm:$0xf] %v495
                  %v497 = vld [vmem:[%s363 + $0x210] sm:$0xf]
                  %498 = vst [vmem:[%s364 + $0x108] sm:$0xf] %v497
                  %v499 = vld [vmem:[%s363 + $0x218] sm:$0xf]
                  %500 = vst [vmem:[%s364 + $0x10c] sm:$0xf] %v499
                  %v501 = vld [vmem:[%s363 + $0x220] sm:$0xf]
                  %502 = vst [vmem:[%s364 + $0x110] sm:$0xf] %v501
                  %v503 = vld [vmem:[%s363 + $0x228] sm:$0xf]
                  %504 = vst [vmem:[%s364 + $0x114] sm:$0xf] %v503
                  %v505 = vld [vmem:[%s363 + $0x230] sm:$0xf]
                  %506 = vst [vmem:[%s364 + $0x118] sm:$0xf] %v505
                  %v507 = vld [vmem:[%s363 + $0x238] sm:$0xf]
                  %508 = vst [vmem:[%s364 + $0x11c] sm:$0xf] %v507
                $region71: #{_lambda_.1} parent=58 // loop_footer
                  %s362 = sadd.s32 1, %s358
                $region72: #{_lambda_.1} parent=58 // loop_footer_branch
                  %357 = sbr.rel target = $region68
                $region73: #{_lambda_.1} parent=58 // loop_exit
                  _
              $region59: #{_lambda_.1} parent=43 // pred_fallthru
                _
            $region44: #{_lambda_.1} parent=39 // pred_fallthru
              _
            // Predicated region
            $region45: #{_lambda_.1} parent=39 // pred_check
              _
            $region46: #{_lambda_.1} parent=39 // pred_check_branch
              %192 = sbr.rel (0) target = $region48
            $region47: #{_lambda_.1} parent=39 // pred_region
              loop: start=0, step=1, limit=1
              $region49: #{_lambda_.1} parent=47 // loop_pre_header
                _
              $region50: #{_lambda_.1} parent=47 // loop_header
                %s195 = sphi 0, %s199
                %p196 = scmp.ge.s32.totalorder %s195, 1
                %s200 = sphi %s186, %s186
                %s201 = sphi %s184, %s184
              $region51: #{_lambda_.1} parent=47 // loop_header_branch
                %198 = sbr.rel (%p196) target = $region55
              $region52: #{_lambda_.1} parent=47 // loop_body
                %v202 = vld [vmem:[%s200] sm:$0xf]
                %203 = vst [vmem:[%s201] sm:$0xf] %v202
                %v204 = vld [vmem:[%s200 + $0x8] sm:$0xf]
                %205 = vst [vmem:[%s201 + $0x4] sm:$0xf] %v204
                %v206 = vld [vmem:[%s200 + $0x10] sm:$0xf]
                %207 = vst [vmem:[%s201 + $0x8] sm:$0xf] %v206
                %v208 = vld [vmem:[%s200 + $0x18] sm:$0xf]
                %209 = vst [vmem:[%s201 + $0xc] sm:$0xf] %v208
                %v210 = vld [vmem:[%s200 + $0x20] sm:$0xf]
                %211 = vst [vmem:[%s201 + $0x10] sm:$0xf] %v210
                %v212 = vld [vmem:[%s200 + $0x28] sm:$0xf]
                %213 = vst [vmem:[%s201 + $0x14] sm:$0xf] %v212
                %v214 = vld [vmem:[%s200 + $0x30] sm:$0xf]
                %215 = vst [vmem:[%s201 + $0x18] sm:$0xf] %v214
                %v216 = vld [vmem:[%s200 + $0x38] sm:$0xf]
                %217 = vst [vmem:[%s201 + $0x1c] sm:$0xf] %v216
                %v218 = vld [vmem:[%s200 + $0x40] sm:$0xf]
                %219 = vst [vmem:[%s201 + $0x20] sm:$0xf] %v218
                %v220 = vld [vmem:[%s200 + $0x48] sm:$0xf]
                %221 = vst [vmem:[%s201 + $0x24] sm:$0xf] %v220
                %v222 = vld [vmem:[%s200 + $0x50] sm:$0xf]
                %223 = vst [vmem:[%s201 + $0x28] sm:$0xf] %v222
                %v224 = vld [vmem:[%s200 + $0x58] sm:$0xf]
                %225 = vst [vmem:[%s201 + $0x2c] sm:$0xf] %v224
                %v226 = vld [vmem:[%s200 + $0x60] sm:$0xf]
                %227 = vst [vmem:[%s201 + $0x30] sm:$0xf] %v226
                %v228 = vld [vmem:[%s200 + $0x68] sm:$0xf]
                %229 = vst [vmem:[%s201 + $0x34] sm:$0xf] %v228
                %v230 = vld [vmem:[%s200 + $0x70] sm:$0xf]
                %231 = vst [vmem:[%s201 + $0x38] sm:$0xf] %v230
                %v232 = vld [vmem:[%s200 + $0x78] sm:$0xf]
                %233 = vst [vmem:[%s201 + $0x3c] sm:$0xf] %v232
                %v234 = vld [vmem:[%s200 + $0x80] sm:$0xf]
                %235 = vst [vmem:[%s201 + $0x40] sm:$0xf] %v234
                %v236 = vld [vmem:[%s200 + $0x88] sm:$0xf]
                %237 = vst [vmem:[%s201 + $0x44] sm:$0xf] %v236
                %v238 = vld [vmem:[%s200 + $0x90] sm:$0xf]
                %239 = vst [vmem:[%s201 + $0x48] sm:$0xf] %v238
                %v240 = vld [vmem:[%s200 + $0x98] sm:$0xf]
                %241 = vst [vmem:[%s201 + $0x4c] sm:$0xf] %v240
                %v242 = vld [vmem:[%s200 + $0xa0] sm:$0xf]
                %243 = vst [vmem:[%s201 + $0x50] sm:$0xf] %v242
                %v244 = vld [vmem:[%s200 + $0xa8] sm:$0xf]
                %245 = vst [vmem:[%s201 + $0x54] sm:$0xf] %v244
                %v246 = vld [vmem:[%s200 + $0xb0] sm:$0xf]
                %247 = vst [vmem:[%s201 + $0x58] sm:$0xf] %v246
                %v248 = vld [vmem:[%s200 + $0xb8] sm:$0xf]
                %249 = vst [vmem:[%s201 + $0x5c] sm:$0xf] %v248
                %v250 = vld [vmem:[%s200 + $0xc0] sm:$0xf]
                %251 = vst [vmem:[%s201 + $0x60] sm:$0xf] %v250
                %v252 = vld [vmem:[%s200 + $0xc8] sm:$0xf]
                %253 = vst [vmem:[%s201 + $0x64] sm:$0xf] %v252
                %v254 = vld [vmem:[%s200 + $0xd0] sm:$0xf]
                %255 = vst [vmem:[%s201 + $0x68] sm:$0xf] %v254
                %v256 = vld [vmem:[%s200 + $0xd8] sm:$0xf]
                %257 = vst [vmem:[%s201 + $0x6c] sm:$0xf] %v256
                %v258 = vld [vmem:[%s200 + $0xe0] sm:$0xf]
                %259 = vst [vmem:[%s201 + $0x70] sm:$0xf] %v258
                %v260 = vld [vmem:[%s200 + $0xe8] sm:$0xf]
                %261 = vst [vmem:[%s201 + $0x74] sm:$0xf] %v260
                %v262 = vld [vmem:[%s200 + $0xf0] sm:$0xf]
                %263 = vst [vmem:[%s201 + $0x78] sm:$0xf] %v262
                %v264 = vld [vmem:[%s200 + $0xf8] sm:$0xf]
                %265 = vst [vmem:[%s201 + $0x7c] sm:$0xf] %v264
                %v266 = vld [vmem:[%s200 + $0x100] sm:$0xf]
                %267 = vst [vmem:[%s201 + $0x80] sm:$0xf] %v266
                %v268 = vld [vmem:[%s200 + $0x108] sm:$0xf]
                %269 = vst [vmem:[%s201 + $0x84] sm:$0xf] %v268
                %v270 = vld [vmem:[%s200 + $0x110] sm:$0xf]
                %271 = vst [vmem:[%s201 + $0x88] sm:$0xf] %v270
                %v272 = vld [vmem:[%s200 + $0x118] sm:$0xf]
                %273 = vst [vmem:[%s201 + $0x8c] sm:$0xf] %v272
                %v274 = vld [vmem:[%s200 + $0x120] sm:$0xf]
                %275 = vst [vmem:[%s201 + $0x90] sm:$0xf] %v274
                %v276 = vld [vmem:[%s200 + $0x128] sm:$0xf]
                %277 = vst [vmem:[%s201 + $0x94] sm:$0xf] %v276
                %v278 = vld [vmem:[%s200 + $0x130] sm:$0xf]
                %279 = vst [vmem:[%s201 + $0x98] sm:$0xf] %v278
                %v280 = vld [vmem:[%s200 + $0x138] sm:$0xf]
                %281 = vst [vmem:[%s201 + $0x9c] sm:$0xf] %v280
                %v282 = vld [vmem:[%s200 + $0x140] sm:$0xf]
                %283 = vst [vmem:[%s201 + $0xa0] sm:$0xf] %v282
                %v284 = vld [vmem:[%s200 + $0x148] sm:$0xf]
                %285 = vst [vmem:[%s201 + $0xa4] sm:$0xf] %v284
                %v286 = vld [vmem:[%s200 + $0x150] sm:$0xf]
                %287 = vst [vmem:[%s201 + $0xa8] sm:$0xf] %v286
                %v288 = vld [vmem:[%s200 + $0x158] sm:$0xf]
                %289 = vst [vmem:[%s201 + $0xac] sm:$0xf] %v288
                %v290 = vld [vmem:[%s200 + $0x160] sm:$0xf]
                %291 = vst [vmem:[%s201 + $0xb0] sm:$0xf] %v290
                %v292 = vld [vmem:[%s200 + $0x168] sm:$0xf]
                %293 = vst [vmem:[%s201 + $0xb4] sm:$0xf] %v292
                %v294 = vld [vmem:[%s200 + $0x170] sm:$0xf]
                %295 = vst [vmem:[%s201 + $0xb8] sm:$0xf] %v294
                %v296 = vld [vmem:[%s200 + $0x178] sm:$0xf]
                %297 = vst [vmem:[%s201 + $0xbc] sm:$0xf] %v296
                %v298 = vld [vmem:[%s200 + $0x180] sm:$0xf]
                %299 = vst [vmem:[%s201 + $0xc0] sm:$0xf] %v298
                %v300 = vld [vmem:[%s200 + $0x188] sm:$0xf]
                %301 = vst [vmem:[%s201 + $0xc4] sm:$0xf] %v300
                %v302 = vld [vmem:[%s200 + $0x190] sm:$0xf]
                %303 = vst [vmem:[%s201 + $0xc8] sm:$0xf] %v302
                %v304 = vld [vmem:[%s200 + $0x198] sm:$0xf]
                %305 = vst [vmem:[%s201 + $0xcc] sm:$0xf] %v304
                %v306 = vld [vmem:[%s200 + $0x1a0] sm:$0xf]
                %307 = vst [vmem:[%s201 + $0xd0] sm:$0xf] %v306
                %v308 = vld [vmem:[%s200 + $0x1a8] sm:$0xf]
                %309 = vst [vmem:[%s201 + $0xd4] sm:$0xf] %v308
                %v310 = vld [vmem:[%s200 + $0x1b0] sm:$0xf]
                %311 = vst [vmem:[%s201 + $0xd8] sm:$0xf] %v310
                %v312 = vld [vmem:[%s200 + $0x1b8] sm:$0xf]
                %313 = vst [vmem:[%s201 + $0xdc] sm:$0xf] %v312
                %v314 = vld [vmem:[%s200 + $0x1c0] sm:$0xf]
                %315 = vst [vmem:[%s201 + $0xe0] sm:$0xf] %v314
                %v316 = vld [vmem:[%s200 + $0x1c8] sm:$0xf]
                %317 = vst [vmem:[%s201 + $0xe4] sm:$0xf] %v316
                %v318 = vld [vmem:[%s200 + $0x1d0] sm:$0xf]
                %319 = vst [vmem:[%s201 + $0xe8] sm:$0xf] %v318
                %v320 = vld [vmem:[%s200 + $0x1d8] sm:$0xf]
                %321 = vst [vmem:[%s201 + $0xec] sm:$0xf] %v320
                %v322 = vld [vmem:[%s200 + $0x1e0] sm:$0xf]
                %323 = vst [vmem:[%s201 + $0xf0] sm:$0xf] %v322
                %v324 = vld [vmem:[%s200 + $0x1e8] sm:$0xf]
                %325 = vst [vmem:[%s201 + $0xf4] sm:$0xf] %v324
                %v326 = vld [vmem:[%s200 + $0x1f0] sm:$0xf]
                %327 = vst [vmem:[%s201 + $0xf8] sm:$0xf] %v326
                %v328 = vld [vmem:[%s200 + $0x1f8] sm:$0xf]
                %329 = vst [vmem:[%s201 + $0xfc] sm:$0xf] %v328
                %v330 = vld [vmem:[%s200 + $0x200] sm:$0xf]
                %331 = vst [vmem:[%s201 + $0x100] sm:$0xf] %v330
                %v332 = vld [vmem:[%s200 + $0x208] sm:$0xf]
                %333 = vst [vmem:[%s201 + $0x104] sm:$0xf] %v332
                %v334 = vld [vmem:[%s200 + $0x210] sm:$0xf]
                %335 = vst [vmem:[%s201 + $0x108] sm:$0xf] %v334
                %v336 = vld [vmem:[%s200 + $0x218] sm:$0xf]
                %337 = vst [vmem:[%s201 + $0x10c] sm:$0xf] %v336
                %v338 = vld [vmem:[%s200 + $0x220] sm:$0xf]
                %339 = vst [vmem:[%s201 + $0x110] sm:$0xf] %v338
                %v340 = vld [vmem:[%s200 + $0x228] sm:$0xf]
                %341 = vst [vmem:[%s201 + $0x114] sm:$0xf] %v340
                %v342 = vld [vmem:[%s200 + $0x230] sm:$0xf]
                %343 = vst [vmem:[%s201 + $0x118] sm:$0xf] %v342
                %v344 = vld [vmem:[%s200 + $0x238] sm:$0xf]
                %345 = vst [vmem:[%s201 + $0x11c] sm:$0xf] %v344
              $region53: #{_lambda_.1} parent=47 // loop_footer
                %s199 = sadd.s32 1, %s195
              $region54: #{_lambda_.1} parent=47 // loop_footer_branch
                %194 = sbr.rel target = $region50
              $region55: #{_lambda_.1} parent=47 // loop_exit
                _
            $region48: #{_lambda_.1} parent=39 // pred_fallthru
              _
          $region40: #{_lambda_.1} parent=35 // pred_fallthru
            _
          %509 = vnop
        $region36: #{_lambda_.1} parent=31 // pred_fallthru
          _
      $region32: #{_lambda_.1} parent=5 // pred_fallthru
        _
      %p510 = scmp.le.s32.totalorder 1, %s11
      %p511 = scmp.lt.s32.totalorder %s11, 3
      %p512 = pnand %p510, %p511
      %p513 = pneg %p512
      // Predicated region
      $region74: #{_lambda_.1} parent=5 // pred_check
        _
      $region75: #{_lambda_.1} parent=5 // pred_check_branch
        %515 = sbr.rel (%p512) target = $region77
      $region76: #{_lambda_.1} parent=5 // pred_region
        %s516 = ssub.s32 %s11, 1
        %s517 = sand.u32 %s108, 1
        %s518 = sand.u32 %s108, 1
        %s519 = smul.addr %s518, 288
        %s520 = scalar_lea.vmem [#allocation3], %s519
        // Predicated region
        $region78: #{_lambda_.1} parent=76 // pred_check
          %p521 = pneg %p121
        $region79: #{_lambda_.1} parent=76 // pred_check_branch
          %523 = sbr.rel (%p521) target = $region81
        $region80: #{_lambda_.1} parent=76 // pred_region
          _
        $region81: #{_lambda_.1} parent=76 // pred_fallthru
          _
        %p524 = pneg %p32
        %p525 = pneg %p29
        %p526 = pneg %p53
        %p527 = pneg %p50
        %p528 = pneg %p74
        %p529 = pneg %p71
        %p530 = pneg %p95
        %p531 = pneg %p92
        %s532 = sand.u32 %s108, 1
        %s533 = sand.u32 %s108, 1
        %s534 = smul.addr %s533, 288
        %s535 = scalar_lea.vmem [#allocation3], %s534
        %p536 = pneg %p121
        %p537 = pneg %p118
        %p538 = pneg %p147
        %p539 = pneg %p144
        %s540 = sand.u32 %s134, 1
        %s541 = sand.u32 %s134, 1
        %s542 = smul.addr %s541, 32
        %s543 = scalar_lea.vmem [#allocation4], %s542
        %v545 = vld [vmem:[%s1] sm:$0xff]
        %v546 = vld [vmem:[%s1 + $0x8] sm:$0xff]
        %v547 = vld [vmem:[%s1 + $0x10] sm:$0xff]
        %v548 = vld [vmem:[%s1 + $0x18] sm:$0xff]
        %550 = vset.pattern.permute.xlu0 0
        %551 = vperm.xlu0 %550, %v545
        %v552 = vpop.permute.xlu0 %551
        %555 = vset.pattern.permute.xlu0 0
        %556 = vperm.xlu0 %555, %v546
        %v557 = vpop.permute.xlu0 %556
        %560 = vset.pattern.permute.xlu0 0
        %561 = vperm.xlu0 %560, %v547
        %v562 = vpop.permute.xlu0 %561
        %565 = vset.pattern.permute.xlu0 0
        %566 = vperm.xlu0 %565, %v548
        %v567 = vpop.permute.xlu0 %566
        %v569 = vld [vmem:[%s0] sm:$0xff]
        %v570 = vld [vmem:[%s0 + $0x8] sm:$0xff]
        %v571 = vld [vmem:[%s0 + $0x10] sm:$0xff]
        %v572 = vld [vmem:[%s0 + $0x18] sm:$0xff]
        %v573 = vld [vmem:[%s520] sm:$0xf]
        %v574 = vld [vmem:[%s520 + $0x4] sm:$0xf]
        %v575 = vld [vmem:[%s520 + $0x8] sm:$0xf]
        %v576 = vld [vmem:[%s520 + $0xc] sm:$0xf]
        %v577 = vld [vmem:[%s520 + $0x10] sm:$0xf]
        %v578 = vld [vmem:[%s520 + $0x14] sm:$0xf]
        %v579 = vld [vmem:[%s520 + $0x18] sm:$0xf]
        %v580 = vld [vmem:[%s520 + $0x1c] sm:$0xf]
        %v581 = vld [vmem:[%s520 + $0x20] sm:$0xf]
        %v582 = vld [vmem:[%s520 + $0x24] sm:$0xf]
        %v583 = vld [vmem:[%s520 + $0x28] sm:$0xf]
        %v584 = vld [vmem:[%s520 + $0x2c] sm:$0xf]
        %v585 = vld [vmem:[%s520 + $0x30] sm:$0xf]
        %v586 = vld [vmem:[%s520 + $0x34] sm:$0xf]
        %v587 = vld [vmem:[%s520 + $0x38] sm:$0xf]
        %v588 = vld [vmem:[%s520 + $0x3c] sm:$0xf]
        %v589 = vld [vmem:[%s520 + $0x40] sm:$0xf]
        %v590 = vld [vmem:[%s520 + $0x44] sm:$0xf]
        %v591 = vld [vmem:[%s520 + $0x48] sm:$0xf]
        %v592 = vld [vmem:[%s520 + $0x4c] sm:$0xf]
        %v593 = vld [vmem:[%s520 + $0x50] sm:$0xf]
        %v594 = vld [vmem:[%s520 + $0x54] sm:$0xf]
        %v595 = vld [vmem:[%s520 + $0x58] sm:$0xf]
        %v596 = vld [vmem:[%s520 + $0x5c] sm:$0xf]
        %v601 = vunpack.c.l.b16 %v569
        %v602 = vunpack.c.h.b16 %v569
        %v603 = vunpack.c.l.b16 %v570
        %v604 = vunpack.c.h.b16 %v570
        %v605 = vunpack.c.l.b16 %v571
        %v606 = vunpack.c.h.b16 %v571
        %v607 = vunpack.c.l.b16 %v572
        %v608 = vunpack.c.h.b16 %v572
        %v609 = vpack.c.b16 %v603, %v601
        %v610 = vpack.c.b16 %v604, %v602
        %v611 = vpack.c.b16 %v607, %v605
        %v612 = vpack.c.b16 %v608, %v606
        %v639 = vunpack.c.l.b16 %v573
        %v640 = vunpack.c.l.b16 %v574
        %v641 = vunpack.c.l.b16 %v575
        %v642 = vunpack.c.l.b16 %v576
        %v643 = vunpack.c.l.b16 %v577
        %v644 = vunpack.c.l.b16 %v578
        %v645 = vunpack.c.l.b16 %v579
        %v646 = vunpack.c.l.b16 %v580
        %v647 = vunpack.c.l.b16 %v581
        %v648 = vunpack.c.l.b16 %v582
        %v649 = vunpack.c.l.b16 %v583
        %v650 = vunpack.c.l.b16 %v584
        %v651 = vunpack.c.l.b16 %v585
        %v652 = vunpack.c.l.b16 %v586
        %v653 = vunpack.c.l.b16 %v587
        %v654 = vunpack.c.l.b16 %v588
        %v655 = vunpack.c.l.b16 %v589
        %v656 = vunpack.c.l.b16 %v590
        %v657 = vunpack.c.l.b16 %v591
        %v658 = vunpack.c.l.b16 %v592
        %v659 = vunpack.c.l.b16 %v593
        %v660 = vunpack.c.l.b16 %v594
        %v661 = vunpack.c.l.b16 %v595
        %v662 = vunpack.c.l.b16 %v596
        %v663 = vpack.c.b16 %v640, %v639
        %v664 = vpack.c.b16 %v642, %v641
        %v665 = vpack.c.b16 %v644, %v643
        %v666 = vpack.c.b16 %v646, %v645
        %v667 = vpack.c.b16 %v648, %v647
        %v668 = vpack.c.b16 %v650, %v649
        %v669 = vpack.c.b16 %v652, %v651
        %v670 = vpack.c.b16 %v654, %v653
        %v671 = vpack.c.b16 %v656, %v655
        %v672 = vpack.c.b16 %v658, %v657
        %v673 = vpack.c.b16 %v660, %v659
        %v674 = vpack.c.b16 %v662, %v661
        %vm687 = vcmask 523264
        %v689 = vsel %vm687, %v610, 0
        %v692 = vsel %vm687, %v612, 0
        %694 = vmatprep.subr.bf16.mxu0 0
        %695 = vmatpush1.bf16.msra.mxu0 %v663
        %696 = vmatprep.subr.bf16.mxu0 0
        %697 = vmatpush1.bf16.msra.mxu0 %v664
        %698 = vmatprep.subr.bf16.mxu0 0
        %699 = vmatpush1.bf16.msra.mxu0 %v665
        %700 = vmatprep.subr.bf16.mxu0 0
        %701 = vmatpush1.bf16.msra.mxu0 %v666
        %702 = vmatprep.subr.bf16.mxu0 0
        %703 = vmatpush1.bf16.msra.mxu0 %v667
        %704 = vmatprep.subr.bf16.mxu0 0
        %705 = vmatpush1.bf16.msra.mxu0 %v668
        %706 = vmatprep.subr.bf16.mxu0 0
        %707 = vmatpush1.bf16.msra.mxu0 %v669
        %708 = vmatprep.subr.bf16.mxu0 0
        %709 = vmatpush1.bf16.msra.mxu0 %v670
        %710 = vmatprep.subr.bf16.mxu0 0
        %711 = vmatpush1.bf16.msra.mxu0 %v671
        %712 = vmatprep.subr.bf16.mxu0 0
        %713 = vmatpush1.bf16.msra.mxu0 %v672
        %714 = vmatprep.subr.bf16.mxu0 0
        %715 = vmatpush1.bf16.msra.mxu0 %v673
        %716 = vmatprep.subr.bf16.mxu0 0
        %717 = vmatpush1.bf16.msra.mxu0 %v674
        %718 = vmatprep.subr.bf16.mxu0 0
        %719 = vmatpush1.bf16.msra.mxu0 0
        %720 = vmatprep.subr.bf16.mxu0 0
        %721 = vmatpush1.bf16.msra.mxu0 0
        %722 = vmatprep.subr.bf16.mxu0 0
        %723 = vmatpush1.bf16.msra.mxu0 0
        %724 = vmatprep.subr.bf16.mxu0 0
        %725 = vmatpush1.bf16.msra.mxu0 0
        %726 = vmatprep.mubr.bf16.mxu0 %v689
        %727 = vmatmul.mubr.bf16.gmra.mrb[0].mxu0 %v609
        %v728 = vpop.f32.mrb[0].mxu0
        %v729 = vadd.f32 %v552, %v728
        %v730 = vpop.f32.mrb[0].mxu0
        %v731 = vpop.f32.mrb[0].mxu0
        %v732 = vadd.f32 %v557, %v731
        %v733 = vpop.f32.mrb[0].mxu0
        %734 = vmatprep.mubr.bf16.mxu0 %v692
        %735 = vmatmul.mubr.bf16.gmra.mrb[0].mxu0 %v611
        %v736 = vpop.f32.mrb[0].mxu0
        %v737 = vadd.f32 %v562, %v736
        %v738 = vpop.f32.mrb[0].mxu0
        %v739 = vpop.f32.mrb[0].mxu0
        %v740 = vadd.f32 %v567, %v739
        %v741 = vpop.f32.mrb[0].mxu0
        %742 = vdwg.mxu0
        %v743 = vmax.f32 %v729, 0.0
        %v744 = vmax.f32 %v732, 0.0
        %v745 = vmax.f32 %v737, 0.0
        %v746 = vmax.f32 %v740, 0.0
        %v747 = vpack.c.bf16 %v744, %v743
        %v748 = vpack.c.bf16 %v746, %v745
        %749 = vst [vmem:[#allocation2] sm:$0xff] %v747
        %750 = vst [vmem:[#allocation2 + $0x8] sm:$0xff] %v748
        %v751 = vld [vmem:[%s0] sm:$0xff]
        %v752 = vld [vmem:[%s0 + $0x8] sm:$0xff]
        %v753 = vld [vmem:[%s0 + $0x10] sm:$0xff]
        %v754 = vld [vmem:[%s0 + $0x18] sm:$0xff]
        %s755 = scalar_lea.vmem %s520, 96 [#allocation3]
        %v756 = vld [vmem:[%s755] sm:$0xf]
        %v757 = vld [vmem:[%s755 + $0x4] sm:$0xf]
        %v758 = vld [vmem:[%s755 + $0x8] sm:$0xf]
        %v759 = vld [vmem:[%s755 + $0xc] sm:$0xf]
        %v760 = vld [vmem:[%s755 + $0x10] sm:$0xf]
        %v761 = vld [vmem:[%s755 + $0x14] sm:$0xf]
        %v762 = vld [vmem:[%s755 + $0x18] sm:$0xf]
        %v763 = vld [vmem:[%s755 + $0x1c] sm:$0xf]
        %v764 = vld [vmem:[%s755 + $0x20] sm:$0xf]
        %v765 = vld [vmem:[%s755 + $0x24] sm:$0xf]
        %v766 = vld [vmem:[%s755 + $0x28] sm:$0xf]
        %v767 = vld [vmem:[%s755 + $0x2c] sm:$0xf]
        %v768 = vld [vmem:[%s755 + $0x30] sm:$0xf]
        %v769 = vld [vmem:[%s755 + $0x34] sm:$0xf]
        %v770 = vld [vmem:[%s755 + $0x38] sm:$0xf]
        %v771 = vld [vmem:[%s755 + $0x3c] sm:$0xf]
        %v772 = vld [vmem:[%s755 + $0x40] sm:$0xf]
        %v773 = vld [vmem:[%s755 + $0x44] sm:$0xf]
        %v774 = vld [vmem:[%s755 + $0x48] sm:$0xf]
        %v775 = vld [vmem:[%s755 + $0x4c] sm:$0xf]
        %v776 = vld [vmem:[%s755 + $0x50] sm:$0xf]
        %v777 = vld [vmem:[%s755 + $0x54] sm:$0xf]
        %v778 = vld [vmem:[%s755 + $0x58] sm:$0xf]
        %v779 = vld [vmem:[%s755 + $0x5c] sm:$0xf]
        %v784 = vunpack.c.l.b16 %v751
        %v785 = vunpack.c.h.b16 %v751
        %v786 = vunpack.c.l.b16 %v752
        %v787 = vunpack.c.h.b16 %v752
        %v788 = vunpack.c.l.b16 %v753
        %v789 = vunpack.c.h.b16 %v753
        %v790 = vunpack.c.l.b16 %v754
        %v791 = vunpack.c.h.b16 %v754
        %v792 = vpack.c.b16 %v786, %v784
        %v793 = vpack.c.b16 %v787, %v785
        %v794 = vpack.c.b16 %v790, %v788
        %v795 = vpack.c.b16 %v791, %v789
        %v822 = vunpack.c.l.b16 %v756
        %v823 = vunpack.c.l.b16 %v757
        %v824 = vunpack.c.l.b16 %v758
        %v825 = vunpack.c.l.b16 %v759
        %v826 = vunpack.c.l.b16 %v760
        %v827 = vunpack.c.l.b16 %v761
        %v828 = vunpack.c.l.b16 %v762
        %v829 = vunpack.c.l.b16 %v763
        %v830 = vunpack.c.l.b16 %v764
        %v831 = vunpack.c.l.b16 %v765
        %v832 = vunpack.c.l.b16 %v766
        %v833 = vunpack.c.l.b16 %v767
        %v834 = vunpack.c.l.b16 %v768
        %v835 = vunpack.c.l.b16 %v769
        %v836 = vunpack.c.l.b16 %v770
        %v837 = vunpack.c.l.b16 %v771
        %v838 = vunpack.c.l.b16 %v772
        %v839 = vunpack.c.l.b16 %v773
        %v840 = vunpack.c.l.b16 %v774
        %v841 = vunpack.c.l.b16 %v775
        %v842 = vunpack.c.l.b16 %v776
        %v843 = vunpack.c.l.b16 %v777
        %v844 = vunpack.c.l.b16 %v778
        %v845 = vunpack.c.l.b16 %v779
        %v846 = vpack.c.b16 %v823, %v822
        %v847 = vpack.c.b16 %v825, %v824
        %v848 = vpack.c.b16 %v827, %v826
        %v849 = vpack.c.b16 %v829, %v828
        %v850 = vpack.c.b16 %v831, %v830
        %v851 = vpack.c.b16 %v833, %v832
        %v852 = vpack.c.b16 %v835, %v834
        %v853 = vpack.c.b16 %v837, %v836
        %v854 = vpack.c.b16 %v839, %v838
        %v855 = vpack.c.b16 %v841, %v840
        %v856 = vpack.c.b16 %v843, %v842
        %v857 = vpack.c.b16 %v845, %v844
        %v871 = vsel %vm687, %v793, 0
        %v874 = vsel %vm687, %v795, 0
        %876 = vmatprep.subr.bf16.mxu0 0
        %877 = vmatpush1.bf16.msra.mxu0 %v846
        %878 = vmatprep.subr.bf16.mxu0 0
        %879 = vmatpush1.bf16.msra.mxu0 %v847
        %880 = vmatprep.subr.bf16.mxu0 0
        %881 = vmatpush1.bf16.msra.mxu0 %v848
        %882 = vmatprep.subr.bf16.mxu0 0
        %883 = vmatpush1.bf16.msra.mxu0 %v849
        %884 = vmatprep.subr.bf16.mxu0 0
        %885 = vmatpush1.bf16.msra.mxu0 %v850
        %886 = vmatprep.subr.bf16.mxu0 0
        %887 = vmatpush1.bf16.msra.mxu0 %v851
        %888 = vmatprep.subr.bf16.mxu0 0
        %889 = vmatpush1.bf16.msra.mxu0 %v852
        %890 = vmatprep.subr.bf16.mxu0 0
        %891 = vmatpush1.bf16.msra.mxu0 %v853
        %892 = vmatprep.subr.bf16.mxu0 0
        %893 = vmatpush1.bf16.msra.mxu0 %v854
        %894 = vmatprep.subr.bf16.mxu0 0
        %895 = vmatpush1.bf16.msra.mxu0 %v855
        %896 = vmatprep.subr.bf16.mxu0 0
        %897 = vmatpush1.bf16.msra.mxu0 %v856
        %898 = vmatprep.subr.bf16.mxu0 0
        %899 = vmatpush1.bf16.msra.mxu0 %v857
        %900 = vmatprep.subr.bf16.mxu0 0
        %901 = vmatpush1.bf16.msra.mxu0 0
        %902 = vmatprep.subr.bf16.mxu0 0
        %903 = vmatpush1.bf16.msra.mxu0 0
        %904 = vmatprep.subr.bf16.mxu0 0
        %905 = vmatpush1.bf16.msra.mxu0 0
        %906 = vmatprep.subr.bf16.mxu0 0
        %907 = vmatpush1.bf16.msra.mxu0 0
        %908 = vmatprep.mubr.bf16.mxu0 %v871
        %909 = vmatmul.mubr.bf16.gmra.mrb[0].mxu0 %v792
        %v910 = vpop.f32.mrb[0].mxu0
        %v911 = vadd.f32 %v552, %v910
        %v912 = vpop.f32.mrb[0].mxu0
        %v913 = vpop.f32.mrb[0].mxu0
        %v914 = vadd.f32 %v557, %v913
        %v915 = vpop.f32.mrb[0].mxu0
        %916 = vmatprep.mubr.bf16.mxu0 %v874
        %917 = vmatmul.mubr.bf16.gmra.mrb[0].mxu0 %v794
        %v918 = vpop.f32.mrb[0].mxu0
        %v919 = vadd.f32 %v562, %v918
        %v920 = vpop.f32.mrb[0].mxu0
        %v921 = vpop.f32.mrb[0].mxu0
        %v922 = vadd.f32 %v567, %v921
        %v923 = vpop.f32.mrb[0].mxu0
        %924 = vdwg.mxu0
        %v925 = vmax.f32 %v911, 0.0
        %v926 = vmax.f32 %v914, 0.0
        %v927 = vmax.f32 %v919, 0.0
        %v928 = vmax.f32 %v922, 0.0
        %v929 = vpack.c.bf16 %v926, %v925
        %v930 = vpack.c.bf16 %v928, %v927
        %931 = vst [vmem:[#allocation2 + $0x10] sm:$0xff] %v929
        %932 = vst [vmem:[#allocation2 + $0x18] sm:$0xff] %v930
        %v933 = vld [vmem:[%s0] sm:$0xff]
        %v934 = vld [vmem:[%s0 + $0x8] sm:$0xff]
        %v935 = vld [vmem:[%s0 + $0x10] sm:$0xff]
        %v936 = vld [vmem:[%s0 + $0x18] sm:$0xff]
        %s937 = scalar_lea.vmem %s520, 192 [#allocation3]
        %v938 = vld [vmem:[%s937] sm:$0xf]
        %v939 = vld [vmem:[%s937 + $0x4] sm:$0xf]
        %v940 = vld [vmem:[%s937 + $0x8] sm:$0xf]
        %v941 = vld [vmem:[%s937 + $0xc] sm:$0xf]
        %v942 = vld [vmem:[%s937 + $0x10] sm:$0xf]
        %v943 = vld [vmem:[%s937 + $0x14] sm:$0xf]
        %v944 = vld [vmem:[%s937 + $0x18] sm:$0xf]
        %v945 = vld [vmem:[%s937 + $0x1c] sm:$0xf]
        %v946 = vld [vmem:[%s937 + $0x20] sm:$0xf]
        %v947 = vld [vmem:[%s937 + $0x24] sm:$0xf]
        %v948 = vld [vmem:[%s937 + $0x28] sm:$0xf]
        %v949 = vld [vmem:[%s937 + $0x2c] sm:$0xf]
        %v950 = vld [vmem:[%s937 + $0x30] sm:$0xf]
        %v951 = vld [vmem:[%s937 + $0x34] sm:$0xf]
        %v952 = vld [vmem:[%s937 + $0x38] sm:$0xf]
        %v953 = vld [vmem:[%s937 + $0x3c] sm:$0xf]
        %v954 = vld [vmem:[%s937 + $0x40] sm:$0xf]
        %v955 = vld [vmem:[%s937 + $0x44] sm:$0xf]
        %v956 = vld [vmem:[%s937 + $0x48] sm:$0xf]
        %v957 = vld [vmem:[%s937 + $0x4c] sm:$0xf]
        %v958 = vld [vmem:[%s937 + $0x50] sm:$0xf]
        %v959 = vld [vmem:[%s937 + $0x54] sm:$0xf]
        %v960 = vld [vmem:[%s937 + $0x58] sm:$0xf]
        %v961 = vld [vmem:[%s937 + $0x5c] sm:$0xf]
        %v966 = vunpack.c.l.b16 %v933
        %v967 = vunpack.c.h.b16 %v933
        %v968 = vunpack.c.l.b16 %v934
        %v969 = vunpack.c.h.b16 %v934
        %v970 = vunpack.c.l.b16 %v935
        %v971 = vunpack.c.h.b16 %v935
        %v972 = vunpack.c.l.b16 %v936
        %v973 = vunpack.c.h.b16 %v936
        %v974 = vpack.c.b16 %v968, %v966
        %v975 = vpack.c.b16 %v969, %v967
        %v976 = vpack.c.b16 %v972, %v970
        %v977 = vpack.c.b16 %v973, %v971
        %v1004 = vunpack.c.l.b16 %v938
        %v1005 = vunpack.c.l.b16 %v939
        %v1006 = vunpack.c.l.b16 %v940
        %v1007 = vunpack.c.l.b16 %v941
        %v1008 = vunpack.c.l.b16 %v942
        %v1009 = vunpack.c.l.b16 %v943
        %v1010 = vunpack.c.l.b16 %v944
        %v1011 = vunpack.c.l.b16 %v945
        %v1012 = vunpack.c.l.b16 %v946
        %v1013 = vunpack.c.l.b16 %v947
        %v1014 = vunpack.c.l.b16 %v948
        %v1015 = vunpack.c.l.b16 %v949
        %v1016 = vunpack.c.l.b16 %v950
        %v1017 = vunpack.c.l.b16 %v951
        %v1018 = vunpack.c.l.b16 %v952
        %v1019 = vunpack.c.l.b16 %v953
        %v1020 = vunpack.c.l.b16 %v954
        %v1021 = vunpack.c.l.b16 %v955
        %v1022 = vunpack.c.l.b16 %v956
        %v1023 = vunpack.c.l.b16 %v957
        %v1024 = vunpack.c.l.b16 %v958
        %v1025 = vunpack.c.l.b16 %v959
        %v1026 = vunpack.c.l.b16 %v960
        %v1027 = vunpack.c.l.b16 %v961
        %v1028 = vpack.c.b16 %v1005, %v1004
        %v1029 = vpack.c.b16 %v1007, %v1006
        %v1030 = vpack.c.b16 %v1009, %v1008
        %v1031 = vpack.c.b16 %v1011, %v1010
        %v1032 = vpack.c.b16 %v1013, %v1012
        %v1033 = vpack.c.b16 %v1015, %v1014
        %v1034 = vpack.c.b16 %v1017, %v1016
        %v1035 = vpack.c.b16 %v1019, %v1018
        %v1036 = vpack.c.b16 %v1021, %v1020
        %v1037 = vpack.c.b16 %v1023, %v1022
        %v1038 = vpack.c.b16 %v1025, %v1024
        %v1039 = vpack.c.b16 %v1027, %v1026
        %v1053 = vsel %vm687, %v975, 0
        %v1056 = vsel %vm687, %v977, 0
        %1058 = vmatprep.subr.bf16.mxu0 0
        %1059 = vmatpush1.bf16.msra.mxu0 %v1028
        %1060 = vmatprep.subr.bf16.mxu0 0
        %1061 = vmatpush1.bf16.msra.mxu0 %v1029
        %1062 = vmatprep.subr.bf16.mxu0 0
        %1063 = vmatpush1.bf16.msra.mxu0 %v1030
        %1064 = vmatprep.subr.bf16.mxu0 0
        %1065 = vmatpush1.bf16.msra.mxu0 %v1031
        %1066 = vmatprep.subr.bf16.mxu0 0
        %1067 = vmatpush1.bf16.msra.mxu0 %v1032
        %1068 = vmatprep.subr.bf16.mxu0 0
        %1069 = vmatpush1.bf16.msra.mxu0 %v1033
        %1070 = vmatprep.subr.bf16.mxu0 0
        %1071 = vmatpush1.bf16.msra.mxu0 %v1034
        %1072 = vmatprep.subr.bf16.mxu0 0
        %1073 = vmatpush1.bf16.msra.mxu0 %v1035
        %1074 = vmatprep.subr.bf16.mxu0 0
        %1075 = vmatpush1.bf16.msra.mxu0 %v1036
        %1076 = vmatprep.subr.bf16.mxu0 0
        %1077 = vmatpush1.bf16.msra.mxu0 %v1037
        %1078 = vmatprep.subr.bf16.mxu0 0
        %1079 = vmatpush1.bf16.msra.mxu0 %v1038
        %1080 = vmatprep.subr.bf16.mxu0 0
        %1081 = vmatpush1.bf16.msra.mxu0 %v1039
        %1082 = vmatprep.subr.bf16.mxu0 0
        %1083 = vmatpush1.bf16.msra.mxu0 0
        %1084 = vmatprep.subr.bf16.mxu0 0
        %1085 = vmatpush1.bf16.msra.mxu0 0
        %1086 = vmatprep.subr.bf16.mxu0 0
        %1087 = vmatpush1.bf16.msra.mxu0 0
        %1088 = vmatprep.subr.bf16.mxu0 0
        %1089 = vmatpush1.bf16.msra.mxu0 0
        %1090 = vmatprep.mubr.bf16.mxu0 %v1053
        %1091 = vmatmul.mubr.bf16.gmra.mrb[0].mxu0 %v974
        %v1092 = vpop.f32.mrb[0].mxu0
        %v1093 = vadd.f32 %v552, %v1092
        %v1094 = vpop.f32.mrb[0].mxu0
        %v1095 = vpop.f32.mrb[0].mxu0
        %v1096 = vadd.f32 %v557, %v1095
        %v1097 = vpop.f32.mrb[0].mxu0
        %1098 = vmatprep.mubr.bf16.mxu0 %v1056
        %1099 = vmatmul.mubr.bf16.gmra.mrb[0].mxu0 %v976
        %v1100 = vpop.f32.mrb[0].mxu0
        %v1101 = vadd.f32 %v562, %v1100
        %v1102 = vpop.f32.mrb[0].mxu0
        %v1103 = vpop.f32.mrb[0].mxu0
        %v1104 = vadd.f32 %v567, %v1103
        %v1105 = vpop.f32.mrb[0].mxu0
        %1106 = vdwg.mxu0
        %v1107 = vmax.f32 %v1093, 0.0
        %v1108 = vmax.f32 %v1096, 0.0
        %v1109 = vmax.f32 %v1101, 0.0
        %v1110 = vmax.f32 %v1104, 0.0
        %v1111 = vpack.c.bf16 %v1108, %v1107
        %v1112 = vpack.c.bf16 %v1110, %v1109
        %1113 = vst [vmem:[#allocation2 + $0x20] sm:$0xff] %v1111
        %1114 = vst [vmem:[#allocation2 + $0x28] sm:$0xff] %v1112
        %v1115 = vld [vmem:[%s2] sm:$0xf]
        %v1116 = vld [vmem:[%s2 + $0x4] sm:$0xf]
        %v1117 = vld [vmem:[%s2 + $0x8] sm:$0xf]
        %v1118 = vld [vmem:[%s2 + $0xc] sm:$0xf]
        %v1119 = vld [vmem:[#allocation2] sm:$0xff]
        %v1120 = vld [vmem:[#allocation2 + $0x8] sm:$0xff]
        %v1121 = vld [vmem:[#allocation2 + $0x10] sm:$0xff]
        %v1122 = vld [vmem:[#allocation2 + $0x18] sm:$0xff]
        %v1123 = vld [vmem:[#allocation2 + $0x20] sm:$0xff]
        %v1124 = vld [vmem:[#allocation2 + $0x28] sm:$0xff]
        %v1125 = vld [vmem:[%s3] sm:$0xff]
        %v1126 = vld [vmem:[%s3 + $0x8] sm:$0xff]
        %v1127 = vld [vmem:[%s3 + $0x10] sm:$0xff]
        %v1128 = vld [vmem:[%s3 + $0x18] sm:$0xff]
        %1130 = vset.pattern.permute.xlu0 0
        %1131 = vperm.xlu0 %1130, %v1125
        %v1132 = vpop.permute.xlu0 %1131
        %1135 = vset.pattern.permute.xlu0 0
        %1136 = vperm.xlu0 %1135, %v1126
        %v1137 = vpop.permute.xlu0 %1136
        %1140 = vset.pattern.permute.xlu0 0
        %1141 = vperm.xlu0 %1140, %v1127
        %v1142 = vpop.permute.xlu0 %1141
        %1145 = vset.pattern.permute.xlu0 0
        %1146 = vperm.xlu0 %1145, %v1128
        %v1147 = vpop.permute.xlu0 %1146
        %v1153 = vunpack.c.l.b16 %v1115
        %v1154 = vunpack.c.l.b16 %v1116
        %v1155 = vunpack.c.l.b16 %v1117
        %v1156 = vunpack.c.l.b16 %v1118
        %v1157 = vpack.c.b16 %v1154, %v1153
        %v1158 = vpack.c.b16 %v1156, %v1155
        %vm1159 = vcmask 785408
        %v1161 = vsel %vm1159, %v1157, 0
        %v1164 = vsel %vm1159, %v1158, 0
        %1166 = vmatprep.subr.bf16.mxu0 0
        %1167 = vmatpush1.bf16.msra.mxu0 %v1119
        %1168 = vmatprep.subr.bf16.mxu0 0
        %1169 = vmatpush1.bf16.msra.mxu0 %v1120
        %1170 = vmatprep.subr.bf16.mxu0 0
        %1171 = vmatpush1.bf16.msra.mxu0 %v1121
        %1172 = vmatprep.subr.bf16.mxu0 0
        %1173 = vmatpush1.bf16.msra.mxu0 %v1122
        %1174 = vmatprep.subr.bf16.mxu0 0
        %1175 = vmatpush1.bf16.msra.mxu0 %v1123
        %1176 = vmatprep.subr.bf16.mxu0 0
        %1177 = vmatpush1.bf16.msra.mxu0 %v1124
        %1178 = vmatprep.subr.bf16.mxu0 0
        %1179 = vmatpush1.bf16.msra.mxu0 0
        %1180 = vmatprep.subr.bf16.mxu0 0
        %1181 = vmatpush1.bf16.msra.mxu0 0
        %1182 = vmatprep.subr.bf16.mxu0 0
        %1183 = vmatpush1.bf16.msra.mxu0 0
        %1184 = vmatprep.subr.bf16.mxu0 0
        %1185 = vmatpush1.bf16.msra.mxu0 0
        %1186 = vmatprep.subr.bf16.mxu0 0
        %1187 = vmatpush1.bf16.msra.mxu0 0
        %1188 = vmatprep.subr.bf16.mxu0 0
        %1189 = vmatpush1.bf16.msra.mxu0 0
        %1190 = vmatprep.subr.bf16.mxu0 0
        %1191 = vmatpush1.bf16.msra.mxu0 0
        %1192 = vmatprep.subr.bf16.mxu0 0
        %1193 = vmatpush1.bf16.msra.mxu0 0
        %1194 = vmatprep.subr.bf16.mxu0 0
        %1195 = vmatpush1.bf16.msra.mxu0 0
        %1196 = vmatprep.subr.bf16.mxu0 0
        %1197 = vmatpush1.bf16.msra.mxu0 0
        %1198 = vmatprep.mubr.bf16.mxu0 0
        %1199 = vmatmul.mubr.bf16.gmra.mrb[0].mxu0 %v1161
        %v1200 = vpop.f32.mrb[0].mxu0
        %v1201 = vadd.f32 %v1132, %v1200
        %v1202 = vpop.f32.mrb[0].mxu0
        %v1203 = vpop.f32.mrb[0].mxu0
        %v1204 = vadd.f32 %v1137, %v1203
        %v1205 = vpop.f32.mrb[0].mxu0
        %1206 = vmatprep.mubr.bf16.mxu0 0
        %1207 = vmatmul.mubr.bf16.gmra.mrb[0].mxu0 %v1164
        %v1208 = vpop.f32.mrb[0].mxu0
        %v1209 = vadd.f32 %v1142, %v1208
        %v1210 = vpop.f32.mrb[0].mxu0
        %v1211 = vpop.f32.mrb[0].mxu0
        %v1212 = vadd.f32 %v1147, %v1211
        %v1213 = vpop.f32.mrb[0].mxu0
        %1214 = vdwg.mxu0
        %v1215 = vmax.f32 %v1201, 0.0
        %v1216 = vmax.f32 %v1204, 0.0
        %v1217 = vmax.f32 %v1209, 0.0
        %v1218 = vmax.f32 %v1212, 0.0
        %1219 = vst [vmem:[%s543] sm:$0xff] %v1215
        %1220 = vst [vmem:[%s543 + $0x8] sm:$0xff] %v1216
        %1221 = vst [vmem:[%s543 + $0x10] sm:$0xff] %v1217
        %1222 = vst [vmem:[%s543 + $0x18] sm:$0xff] %v1218
        %s1223 = sand.u32 %s134, 1
        %s1224 = sand.u32 %s134, 1
        %s1225 = smul.addr %s1224, 32
        %s1226 = scalar_lea.vmem [#allocation4], %s1225
        // Predicated region
        $region82: #{_lambda_.1} parent=76 // pred_check
          %p1227 = pneg %p144
        $region83: #{_lambda_.1} parent=76 // pred_check_branch
          %1229 = sbr.rel (%p1227) target = $region85
        $region84: #{_lambda_.1} parent=76 // pred_region
          %s1230 = smul.addr %s16, 8
          %s1231 = scalar_lea.vmem %s5, %s1230
          // Predicated region
          $region86: #{_lambda_.1} parent=84 // pred_check
            _
          $region87: #{_lambda_.1} parent=84 // pred_check_branch
            %1233 = sbr.rel (0) target = $region89
          $region88: #{_lambda_.1} parent=84 // pred_region
            // Predicated region
            $region90: #{_lambda_.1} parent=88 // pred_check
              _
            $region91: #{_lambda_.1} parent=88 // pred_check_branch
              %1235 = sbr.rel (0) target = $region93
            $region92: #{_lambda_.1} parent=88 // pred_region
              // Predicated region
              $region105: #{_lambda_.1} parent=92 // pred_check
                _
              $region106: #{_lambda_.1} parent=92 // pred_check_branch
                %1256 = sbr.rel (0) target = $region108
              $region107: #{_lambda_.1} parent=92 // pred_region
                loop: start=0, step=1, limit=1
                $region109: #{_lambda_.1} parent=107 // loop_pre_header
                  _
                $region110: #{_lambda_.1} parent=107 // loop_header
                  %s1258 = sphi 0, %s1262
                  %p1259 = scmp.ge.s32.totalorder %s1258, 1
                  %s1263 = sphi %s1226, %s1226
                  %s1264 = sphi %s1231, %s1231
                $region111: #{_lambda_.1} parent=107 // loop_header_branch
                  %1261 = sbr.rel (%p1259) target = $region115
                $region112: #{_lambda_.1} parent=107 // loop_body
                  %v1265 = vld [vmem:[%s1263] sm:$0xff]
                  %1266 = vst [vmem:[%s1264] sm:$0xff] %v1265
                  %v1267 = vld [vmem:[%s1263 + $0x8] sm:$0xff]
                  %1268 = vst [vmem:[%s1264 + $0x10] sm:$0xff] %v1267
                  %v1269 = vld [vmem:[%s1263 + $0x10] sm:$0xff]
                  %1270 = vst [vmem:[%s1264 + $0x20] sm:$0xff] %v1269
                  %v1271 = vld [vmem:[%s1263 + $0x18] sm:$0xff]
                  %1272 = vst [vmem:[%s1264 + $0x30] sm:$0xff] %v1271
                $region113: #{_lambda_.1} parent=107 // loop_footer
                  %s1262 = sadd.s32 1, %s1258
                $region114: #{_lambda_.1} parent=107 // loop_footer_branch
                  %1257 = sbr.rel target = $region110
                $region115: #{_lambda_.1} parent=107 // loop_exit
                  _
              $region108: #{_lambda_.1} parent=92 // pred_fallthru
                _
              // Predicated region
              $region116: #{_lambda_.1} parent=92 // pred_check
                _
              $region117: #{_lambda_.1} parent=92 // pred_check_branch
                %1274 = sbr.rel target = $region119
              $region118: #{_lambda_.1} parent=92 // pred_region
                _
              $region119: #{_lambda_.1} parent=92 // pred_fallthru
                _
            $region93: #{_lambda_.1} parent=88 // pred_fallthru
              _
            // Predicated region
            $region94: #{_lambda_.1} parent=88 // pred_check
              _
            $region95: #{_lambda_.1} parent=88 // pred_check_branch
              %1237 = sbr.rel target = $region97
            $region96: #{_lambda_.1} parent=88 // pred_region
              loop: start=0, step=1, limit=1
              $region98: #{_lambda_.1} parent=96 // loop_pre_header
                _
              $region99: #{_lambda_.1} parent=96 // loop_header
                %s1240 = sphi 0, %s1244
                %p1241 = scmp.ge.s32.totalorder %s1240, 1
                %s1245 = sphi %s1226, %s1226
                %s1246 = sphi %s1231, %s1231
              $region100: #{_lambda_.1} parent=96 // loop_header_branch
                %1243 = sbr.rel (%p1241) target = $region104
              $region101: #{_lambda_.1} parent=96 // loop_body
                %v1247 = vld [vmem:[%s1245] sm:$0xff]
                %1248 = vst [vmem:[%s1246] sm:$0xff] %v1247
                %v1249 = vld [vmem:[%s1245 + $0x8] sm:$0xff]
                %1250 = vst [vmem:[%s1246 + $0x10] sm:$0xff] %v1249
                %v1251 = vld [vmem:[%s1245 + $0x10] sm:$0xff]
                %1252 = vst [vmem:[%s1246 + $0x20] sm:$0xff] %v1251
                %v1253 = vld [vmem:[%s1245 + $0x18] sm:$0xff]
                %1254 = vst [vmem:[%s1246 + $0x30] sm:$0xff] %v1253
              $region102: #{_lambda_.1} parent=96 // loop_footer
                %s1244 = sadd.s32 1, %s1240
              $region103: #{_lambda_.1} parent=96 // loop_footer_branch
                %1239 = sbr.rel target = $region99
              $region104: #{_lambda_.1} parent=96 // loop_exit
                _
            $region97: #{_lambda_.1} parent=88 // pred_fallthru
              _
          $region89: #{_lambda_.1} parent=84 // pred_fallthru
            _
          %1275 = vnop
        $region85: #{_lambda_.1} parent=76 // pred_fallthru
          _
      $region77: #{_lambda_.1} parent=5 // pred_fallthru
        _
      %p1276 = scmp.le.s32.totalorder 2, %s11
      // Predicated region
      $region120: #{_lambda_.1} parent=5 // pred_check
        %p1277 = pneg %p1276
      $region121: #{_lambda_.1} parent=5 // pred_check_branch
        %1279 = sbr.rel (%p1277) target = $region123
      $region122: #{_lambda_.1} parent=5 // pred_region
        %s1280 = ssub.s32 %s11, 2
        // Predicated region
        $region124: #{_lambda_.1} parent=122 // pred_check
          %p1281 = pneg %p150
        $region125: #{_lambda_.1} parent=122 // pred_check_branch
          %1283 = sbr.rel (%p1281) target = $region127
        $region126: #{_lambda_.1} parent=122 // pred_region
          %s1284 = sand.u32 %s135, 1
          %s1285 = sand.u32 %s135, 1
          %s1286 = smul.addr %s1285, 32
          %s1287 = scalar_lea.vmem [#allocation4], %s1286
        $region127: #{_lambda_.1} parent=122 // pred_fallthru
          _
      $region123: #{_lambda_.1} parent=5 // pred_fallthru
        _
    $region6: #{_lambda_.1} parent=1 // loop_footer
      %s15 = sadd.s32 1, %s11
    $region7: #{_lambda_.1} parent=1 // loop_footer_branch
      %10 = sbr.rel target = $region3
    $region8: #{_lambda_.1} parent=1 // loop_exit
      _

</llo_original>
